<compile_context>
chip_gen: v6e
topology: v6e:2x2x1
jax: 0.10.0
libtpu: 0.0.40
codegen_flags: <defaults>
</compile_context>

<pallas_src>
import functools

import jax
import jax.numpy as jnp
from jax.experimental import pallas as pl
from jax.experimental.pallas import tpu as pltpu


def _round_up(n, m):
    return ((n + m - 1) // m) * m


def _rnn_kernel(num_layers, seq_len, seq_pad, in_pad, hidden_pad,
                x_ref, w_ref, fc_ref, out_ref):
    """Single-sequence multi-layer tanh RNN + Linear + log_softmax.

    Weight-slab layout (lane width hidden_pad, all row offsets static and
    multiples of 8):
      layer 0 : rows [0, in_pad)                      W_ih0
                rows [in_pad, in_pad + hidden_pad)    W_hh0
                rows [in_pad + hidden_pad, +8)        b0   (row 0 real)
      layer l>0 (base advances by 2*hidden_pad + 8):
                rows [base, base + 2*hidden_pad)      [W_ih_l ; W_hh_l]
                rows [base + 2*hidden_pad, +8)        b_l  (row 0 real)
    fc slab   : rows [0, hidden_pad)                  W_fc
                rows [hidden_pad, hidden_pad + 8)     b_fc (row 0; padded
                                                      classes carry -1e9)
    """
    f32 = jnp.float32

    # ---- layer 0: hoisted input projection (one lane-dense MXU matmul),
    # then a serial recurrence carried entirely in vregs.
    w_ih0 = w_ref[pl.ds(0, in_pad), :]
    w_hh0 = w_ref[pl.ds(in_pad, hidden_pad), :]
    b0 = w_ref[pl.ds(in_pad + hidden_pad, 1), :]
    proj = jnp.dot(x_ref[...], w_ih0, preferred_element_type=f32) + b0

    h = jnp.zeros((1, hidden_pad), f32)
    rows = []
    # TODO(synk): full unroll is right at T=8; switch to a bounded unroll or a
    # grid axis over time if seq_len grows large.
    for t in range(seq_len):
        h = jnp.tanh(proj[t:t + 1, :]
                     + jnp.dot(h, w_hh0, preferred_element_type=f32))
        rows.append(h)

    # ---- layers > 0: per-step fused matmul against the stacked [W_ih; W_hh]
    # so (layer l, step t) depends only on (l-1, t) and (l, t-1); the fully
    # unrolled DAG then has an L + T - 1 wavefront critical path that the LLO
    # scheduler can exploit (no statement reordering needed).
    off = in_pad + hidden_pad + 8
    for _ in range(1, num_layers):
        w_stack = w_ref[pl.ds(off, 2 * hidden_pad), :]       # (2H, H)
        b_l = w_ref[pl.ds(off + 2 * hidden_pad, 1), :]       # (1, H)
        off += 2 * hidden_pad + 8

        h = jnp.zeros((1, hidden_pad), f32)
        new_rows = []
        for t in range(seq_len):
            z = jnp.concatenate([rows[t], h], axis=1)        # (1, 2*H_pad)
            # TODO(synk): W_stack is loop-invariant per layer; if the bundle
            # dump shows per-step weight re-staging dominating, drive the MXU
            # explicitly with pltpu.matmul_push_rhs/acc_lhs/pop.
            h = jnp.tanh(jnp.dot(z, w_stack, preferred_element_type=f32)
                         + b_l)
            new_rows.append(h)
        rows = new_rows

    # ---- assemble the (T_pad, H_pad) block once, then FC + log_softmax.
    if seq_pad > seq_len:
        rows = rows + [jnp.zeros((1, hidden_pad), f32)] * (seq_pad - seq_len)
    hs = jnp.concatenate(rows, axis=0)                       # (T_pad, H_pad)

    w_fc = fc_ref[pl.ds(0, hidden_pad), :]
    b_fc = fc_ref[pl.ds(hidden_pad, 1), :]
    logits = jnp.dot(hs, w_fc, preferred_element_type=f32) + b_fc
    m = jnp.max(logits, axis=-1, keepdims=True)
    zc = logits - m
    lse = jnp.log(jnp.sum(jnp.exp(zc), axis=-1, keepdims=True))
    out_ref[...] = zc - lse


def pack_params(params, input_size, hidden, num_layers, num_classes):
    """One-time (init-time) padding + packing of all weights into 2 slabs."""
    f32 = jnp.float32
    I_pad = _round_up(input_size, 128)
    H_pad = _round_up(hidden, 128)
    C_pad = _round_up(num_classes, 128)

    rows = I_pad + H_pad + 8 + (num_layers - 1) * (2 * H_pad + 8)
    w_slab = jnp.zeros((rows, H_pad), f32)

    w_ih0, w_hh0, b0 = params["layers"][0]
    w_slab = w_slab.at[:input_size, :hidden].set(w_ih0)
    w_slab = w_slab.at[I_pad:I_pad + hidden, :hidden].set(w_hh0)
    w_slab = w_slab.at[I_pad + H_pad, :hidden].set(b0[0])
    off = I_pad + H_pad + 8
    for l in range(1, num_layers):
        w_ih, w_hh, b = params["layers"][l]
        w_slab = w_slab.at[off:off + hidden, :hidden].set(w_ih)
        w_slab = w_slab.at[off + H_pad:off + H_pad + hidden, :hidden].set(w_hh)
        w_slab = w_slab.at[off + 2 * H_pad, :hidden].set(b[0])
        off += 2 * H_pad + 8

    fc_slab = jnp.zeros((H_pad + 8, C_pad), f32)
    fc_slab = fc_slab.at[:hidden, :num_classes].set(params["w_fc"])
    # Padded class columns get a -1e9 bias (zero weights), so exp() kills
    # them in the log_softmax normalizer (exact in f32).
    fc_slab = fc_slab.at[H_pad, :].set(jnp.full((C_pad,), -1e9, f32))
    fc_slab = fc_slab.at[H_pad, :num_classes].set(params["b_fc"][0])

    return {"w_slab": w_slab, "fc_slab": fc_slab,
            "dims": (input_size, hidden, num_layers, num_classes,
                     I_pad, H_pad, C_pad)}


def rnn_forward(x, packed):
    (input_size, hidden, num_layers, num_classes,
     I_pad, H_pad, C_pad) = packed["dims"]
    x = x.astype(jnp.float32)
    B, T, I = x.shape
    T_pad = _round_up(T, 8)

    # PyTorch `output[-1, :]` with batch_first selects the LAST BATCH ROW
    # (all timesteps); every other batch row is dead compute.
    x_p = jnp.zeros((T_pad, I_pad), jnp.float32).at[:T, :I].set(x[B - 1])

    w_slab = packed["w_slab"]
    fc_slab = packed["fc_slab"]

    footprint = 4 * (x_p.size + w_slab.size + fc_slab.size + T_pad * C_pad)
    # TODO(synk): for large hidden/num_layers, stream per-layer weights over a
    # grid axis with double-buffered DMA; the resident-weights threshold is
    # ~2x lower on v7x (64 MiB VMEM / 32 MiB scoped default).
    vmem_limit = int(2 * footprint) + (1 << 20)

    kernel = functools.partial(
        _rnn_kernel, num_layers, T, T_pad, I_pad, H_pad)
    out_p = pl.pallas_call(
        kernel,
        out_shape=jax.ShapeDtypeStruct((T_pad, C_pad), jnp.float32),
        in_specs=[pl.BlockSpec(memory_space=pltpu.MemorySpace.VMEM)] * 3,
        out_specs=pl.BlockSpec(memory_space=pltpu.MemorySpace.VMEM),
        compiler_params=pltpu.CompilerParams(vmem_limit_bytes=vmem_limit),
    )(x_p, w_slab, fc_slab)
    return out_p[:T, :num_classes]


def init_params(key, input_size, hidden, num_layers, num_classes):
    """Deterministic init mimicking PyTorch's U(-1/sqrt(H), 1/sqrt(H))."""
    k = float(1.0 / (hidden ** 0.5))
    layers = []
    for l in range(num_layers):
        in_f = input_size if l == 0 else hidden
        key, k1, k2, k3, k4 = jax.random.split(key, 5)
        w_ih = jax.random.uniform(k1, (hidden, in_f), jnp.float32, -k, k)
        w_hh = jax.random.uniform(k2, (hidden, hidden), jnp.float32, -k, k)
        b_ih = jax.random.uniform(k3, (hidden,), jnp.float32, -k, k)
        b_hh = jax.random.uniform(k4, (hidden,), jnp.float32, -k, k)
        # pre-transpose weights, fold the two biases together
        layers.append((w_ih.T, w_hh.T, (b_ih + b_hh).reshape(1, hidden)))
    key, k5, k6 = jax.random.split(key, 3)
    w_fc = jax.random.uniform(k5, (num_classes, hidden), jnp.float32, -k, k)
    b_fc = jax.random.uniform(k6, (num_classes,), jnp.float32, -k, k)
    return {"layers": layers, "w_fc": w_fc.T,
            "b_fc": b_fc.reshape(1, num_classes)}


def rnn_reference(x, params, num_layers, hidden, num_classes):
    """Pure-JAX reference with identical semantics (correctness check)."""
    x = x.astype(jnp.float32)
    B, T, _ = x.shape
    outs = x
    for l in range(num_layers):
        w_ih, w_hh, b = params["layers"][l]
        h = jnp.zeros((B, hidden), jnp.float32)
        hs = []
        for t in range(T):
            h = jnp.tanh(outs[:, t, :] @ w_ih + h @ w_hh + b)
            hs.append(h)
        outs = jnp.stack(hs, axis=1)        # (B, T, H)
    last = outs[-1]                         # (T, H) -- last batch row
    logits = last @ params["w_fc"] + params["b_fc"]
    return jax.nn.log_softmax(logits, axis=-1)


if __name__ == "__main__":
    input_size, hidden, num_layers, num_classes = 16, 32, 2, 10
    batch, seq = 2, 8

    key = jax.random.PRNGKey(0)
    kx, kp = jax.random.split(key)
    x = jax.random.normal(kx, (batch, seq, input_size), jnp.float32)
    params = init_params(kp, input_size, hidden, num_layers, num_classes)
    packed = pack_params(params, input_size, hidden, num_layers, num_classes)
    packed = jax.tree_util.tree_map(jax.block_until_ready, packed)  # init-time

    out = rnn_forward(x, packed)
    out = jax.block_until_ready(out)

    ref = rnn_reference(x, params, num_layers, hidden, num_classes)
    assert out.shape == (seq, num_classes)
    assert jnp.allclose(out, ref, atol=2e-4, rtol=2e-4), "mismatch vs reference"

    print("KERNEL_OK")
</pallas_src>

<mosaic_0001>
module attributes {stable_mosaic.version = 11 : i64} {
  func.func @_rnn_kernel(%arg0: memref<8x128xf32, #tpu.memory_space<vmem>>, %arg1: memref<528x128xf32, #tpu.memory_space<vmem>>, %arg2: memref<136x128xf32, #tpu.memory_space<vmem>>, %arg3: memref<8x128xf32, #tpu.memory_space<vmem>>) attributes {dimension_semantics = [], scalar_prefetch = 0 : i64, scratch_operands = 0 : i64, tpu.core_type = #tpu.core_type<tc>} {
    %c0 = arith.constant 0 : index
    %c0_0 = arith.constant 0 : index
    %0 = vector.load %arg1[%c0, %c0_0] : memref<528x128xf32, #tpu.memory_space<vmem>>, vector<128x128xf32>
    %c128 = arith.constant 128 : index
    %c0_1 = arith.constant 0 : index
    %1 = vector.load %arg1[%c128, %c0_1] : memref<528x128xf32, #tpu.memory_space<vmem>>, vector<128x128xf32>
    %c256 = arith.constant 256 : index
    %c0_2 = arith.constant 0 : index
    %2 = vector.load %arg1[%c256, %c0_2] : memref<528x128xf32, #tpu.memory_space<vmem>>, vector<1x128xf32>
    %c0_3 = arith.constant 0 : index
    %c0_4 = arith.constant 0 : index
    %3 = vector.load %arg0[%c0_3, %c0_4] : memref<8x128xf32, #tpu.memory_space<vmem>>, vector<8x128xf32>
    %cst = arith.constant dense<0.000000e+00> : vector<8x128xf32>
    %4 = tpu.matmul %3, %0, %cst {dimension_numbers = #tpu.dot_dimension_numbers<[1], [0], [0], [1], [0, 0, 1, 1], [], []>} : vector<8x128xf32>, vector<128x128xf32>, vector<8x128xf32> -> vector<8x128xf32>
    %5 = vector.broadcast %2 : vector<1x128xf32> to vector<8x128xf32>
    %6 = arith.addf %4, %5 : vector<8x128xf32>
    %cst_5 = arith.constant 0.000000e+00 : f32
    %7 = vector.broadcast %cst_5 : f32 to vector<1x128xf32>
    %8 = vector.extract_strided_slice %6 {offsets = [0, 0], sizes = [1, 128], strides = [1, 1]} : vector<8x128xf32> to vector<1x128xf32>
    %cst_6 = arith.constant dense<0.000000e+00> : vector<1x128xf32>
    %9 = tpu.matmul %7, %1, %cst_6 {dimension_numbers = #tpu.dot_dimension_numbers<[1], [0], [0], [1], [0, 0, 1, 1], [], []>} : vector<1x128xf32>, vector<128x128xf32>, vector<1x128xf32> -> vector<1x128xf32>
    %10 = arith.addf %8, %9 : vector<1x128xf32>
    %11 = math.tanh %10 : vector<1x128xf32>
    %12 = vector.extract_strided_slice %6 {offsets = [1, 0], sizes = [1, 128], strides = [1, 1]} : vector<8x128xf32> to vector<1x128xf32>
    %cst_7 = arith.constant dense<0.000000e+00> : vector<1x128xf32>
    %13 = tpu.matmul %11, %1, %cst_7 {dimension_numbers = #tpu.dot_dimension_numbers<[1], [0], [0], [1], [0, 0, 1, 1], [], []>} : vector<1x128xf32>, vector<128x128xf32>, vector<1x128xf32> -> vector<1x128xf32>
    %14 = arith.addf %12, %13 : vector<1x128xf32>
    %15 = math.tanh %14 : vector<1x128xf32>
    %16 = vector.extract_strided_slice %6 {offsets = [2, 0], sizes = [1, 128], strides = [1, 1]} : vector<8x128xf32> to vector<1x128xf32>
    %cst_8 = arith.constant dense<0.000000e+00> : vector<1x128xf32>
    %17 = tpu.matmul %15, %1, %cst_8 {dimension_numbers = #tpu.dot_dimension_numbers<[1], [0], [0], [1], [0, 0, 1, 1], [], []>} : vector<1x128xf32>, vector<128x128xf32>, vector<1x128xf32> -> vector<1x128xf32>
    %18 = arith.addf %16, %17 : vector<1x128xf32>
    %19 = math.tanh %18 : vector<1x128xf32>
    %20 = vector.extract_strided_slice %6 {offsets = [3, 0], sizes = [1, 128], strides = [1, 1]} : vector<8x128xf32> to vector<1x128xf32>
    %cst_9 = arith.constant dense<0.000000e+00> : vector<1x128xf32>
    %21 = tpu.matmul %19, %1, %cst_9 {dimension_numbers = #tpu.dot_dimension_numbers<[1], [0], [0], [1], [0, 0, 1, 1], [], []>} : vector<1x128xf32>, vector<128x128xf32>, vector<1x128xf32> -> vector<1x128xf32>
    %22 = arith.addf %20, %21 : vector<1x128xf32>
    %23 = math.tanh %22 : vector<1x128xf32>
    %24 = vector.extract_strided_slice %6 {offsets = [4, 0], sizes = [1, 128], strides = [1, 1]} : vector<8x128xf32> to vector<1x128xf32>
    %cst_10 = arith.constant dense<0.000000e+00> : vector<1x128xf32>
    %25 = tpu.matmul %23, %1, %cst_10 {dimension_numbers = #tpu.dot_dimension_numbers<[1], [0], [0], [1], [0, 0, 1, 1], [], []>} : vector<1x128xf32>, vector<128x128xf32>, vector<1x128xf32> -> vector<1x128xf32>
    %26 = arith.addf %24, %25 : vector<1x128xf32>
    %27 = math.tanh %26 : vector<1x128xf32>
    %28 = vector.extract_strided_slice %6 {offsets = [5, 0], sizes = [1, 128], strides = [1, 1]} : vector<8x128xf32> to vector<1x128xf32>
    %cst_11 = arith.constant dense<0.000000e+00> : vector<1x128xf32>
    %29 = tpu.matmul %27, %1, %cst_11 {dimension_numbers = #tpu.dot_dimension_numbers<[1], [0], [0], [1], [0, 0, 1, 1], [], []>} : vector<1x128xf32>, vector<128x128xf32>, vector<1x128xf32> -> vector<1x128xf32>
    %30 = arith.addf %28, %29 : vector<1x128xf32>
    %31 = math.tanh %30 : vector<1x128xf32>
    %32 = vector.extract_strided_slice %6 {offsets = [6, 0], sizes = [1, 128], strides = [1, 1]} : vector<8x128xf32> to vector<1x128xf32>
    %cst_12 = arith.constant dense<0.000000e+00> : vector<1x128xf32>
    %33 = tpu.matmul %31, %1, %cst_12 {dimension_numbers = #tpu.dot_dimension_numbers<[1], [0], [0], [1], [0, 0, 1, 1], [], []>} : vector<1x128xf32>, vector<128x128xf32>, vector<1x128xf32> -> vector<1x128xf32>
    %34 = arith.addf %32, %33 : vector<1x128xf32>
    %35 = math.tanh %34 : vector<1x128xf32>
    %36 = vector.extract_strided_slice %6 {offsets = [7, 0], sizes = [1, 128], strides = [1, 1]} : vector<8x128xf32> to vector<1x128xf32>
    %cst_13 = arith.constant dense<0.000000e+00> : vector<1x128xf32>
    %37 = tpu.matmul %35, %1, %cst_13 {dimension_numbers = #tpu.dot_dimension_numbers<[1], [0], [0], [1], [0, 0, 1, 1], [], []>} : vector<1x128xf32>, vector<128x128xf32>, vector<1x128xf32> -> vector<1x128xf32>
    %38 = arith.addf %36, %37 : vector<1x128xf32>
    %39 = math.tanh %38 : vector<1x128xf32>
    %c264 = arith.constant 264 : index
    %c0_14 = arith.constant 0 : index
    %40 = vector.load %arg1[%c264, %c0_14] : memref<528x128xf32, #tpu.memory_space<vmem>>, vector<256x128xf32>
    %c520 = arith.constant 520 : index
    %c0_15 = arith.constant 0 : index
    %41 = vector.load %arg1[%c520, %c0_15] : memref<528x128xf32, #tpu.memory_space<vmem>>, vector<1x128xf32>
    %cst_16 = arith.constant 0.000000e+00 : f32
    %42 = vector.broadcast %cst_16 : f32 to vector<1x128xf32>
    %43 = tpu.concatenate %11, %42 in 1 : vector<1x128xf32>, vector<1x128xf32> -> vector<1x256xf32>
    %cst_17 = arith.constant dense<0.000000e+00> : vector<1x128xf32>
    %44 = tpu.matmul %43, %40, %cst_17 {dimension_numbers = #tpu.dot_dimension_numbers<[1], [0], [0], [1], [0, 0, 1, 1], [], []>} : vector<1x256xf32>, vector<256x128xf32>, vector<1x128xf32> -> vector<1x128xf32>
    %45 = arith.addf %44, %41 : vector<1x128xf32>
    %46 = math.tanh %45 : vector<1x128xf32>
    %47 = tpu.concatenate %15, %46 in 1 : vector<1x128xf32>, vector<1x128xf32> -> vector<1x256xf32>
    %cst_18 = arith.constant dense<0.000000e+00> : vector<1x128xf32>
    %48 = tpu.matmul %47, %40, %cst_18 {dimension_numbers = #tpu.dot_dimension_numbers<[1], [0], [0], [1], [0, 0, 1, 1], [], []>} : vector<1x256xf32>, vector<256x128xf32>, vector<1x128xf32> -> vector<1x128xf32>
    %49 = arith.addf %48, %41 : vector<1x128xf32>
    %50 = math.tanh %49 : vector<1x128xf32>
    %51 = tpu.concatenate %19, %50 in 1 : vector<1x128xf32>, vector<1x128xf32> -> vector<1x256xf32>
    %cst_19 = arith.constant dense<0.000000e+00> : vector<1x128xf32>
    %52 = tpu.matmul %51, %40, %cst_19 {dimension_numbers = #tpu.dot_dimension_numbers<[1], [0], [0], [1], [0, 0, 1, 1], [], []>} : vector<1x256xf32>, vector<256x128xf32>, vector<1x128xf32> -> vector<1x128xf32>
    %53 = arith.addf %52, %41 : vector<1x128xf32>
    %54 = math.tanh %53 : vector<1x128xf32>
    %55 = tpu.concatenate %23, %54 in 1 : vector<1x128xf32>, vector<1x128xf32> -> vector<1x256xf32>
    %cst_20 = arith.constant dense<0.000000e+00> : vector<1x128xf32>
    %56 = tpu.matmul %55, %40, %cst_20 {dimension_numbers = #tpu.dot_dimension_numbers<[1], [0], [0], [1], [0, 0, 1, 1], [], []>} : vector<1x256xf32>, vector<256x128xf32>, vector<1x128xf32> -> vector<1x128xf32>
    %57 = arith.addf %56, %41 : vector<1x128xf32>
    %58 = math.tanh %57 : vector<1x128xf32>
    %59 = tpu.concatenate %27, %58 in 1 : vector<1x128xf32>, vector<1x128xf32> -> vector<1x256xf32>
    %cst_21 = arith.constant dense<0.000000e+00> : vector<1x128xf32>
    %60 = tpu.matmul %59, %40, %cst_21 {dimension_numbers = #tpu.dot_dimension_numbers<[1], [0], [0], [1], [0, 0, 1, 1], [], []>} : vector<1x256xf32>, vector<256x128xf32>, vector<1x128xf32> -> vector<1x128xf32>
    %61 = arith.addf %60, %41 : vector<1x128xf32>
    %62 = math.tanh %61 : vector<1x128xf32>
    %63 = tpu.concatenate %31, %62 in 1 : vector<1x128xf32>, vector<1x128xf32> -> vector<1x256xf32>
    %cst_22 = arith.constant dense<0.000000e+00> : vector<1x128xf32>
    %64 = tpu.matmul %63, %40, %cst_22 {dimension_numbers = #tpu.dot_dimension_numbers<[1], [0], [0], [1], [0, 0, 1, 1], [], []>} : vector<1x256xf32>, vector<256x128xf32>, vector<1x128xf32> -> vector<1x128xf32>
    %65 = arith.addf %64, %41 : vector<1x128xf32>
    %66 = math.tanh %65 : vector<1x128xf32>
    %67 = tpu.concatenate %35, %66 in 1 : vector<1x128xf32>, vector<1x128xf32> -> vector<1x256xf32>
    %cst_23 = arith.constant dense<0.000000e+00> : vector<1x128xf32>
    %68 = tpu.matmul %67, %40, %cst_23 {dimension_numbers = #tpu.dot_dimension_numbers<[1], [0], [0], [1], [0, 0, 1, 1], [], []>} : vector<1x256xf32>, vector<256x128xf32>, vector<1x128xf32> -> vector<1x128xf32>
    %69 = arith.addf %68, %41 : vector<1x128xf32>
    %70 = math.tanh %69 : vector<1x128xf32>
    %71 = tpu.concatenate %39, %70 in 1 : vector<1x128xf32>, vector<1x128xf32> -> vector<1x256xf32>
    %cst_24 = arith.constant dense<0.000000e+00> : vector<1x128xf32>
    %72 = tpu.matmul %71, %40, %cst_24 {dimension_numbers = #tpu.dot_dimension_numbers<[1], [0], [0], [1], [0, 0, 1, 1], [], []>} : vector<1x256xf32>, vector<256x128xf32>, vector<1x128xf32> -> vector<1x128xf32>
    %73 = arith.addf %72, %41 : vector<1x128xf32>
    %74 = math.tanh %73 : vector<1x128xf32>
    %75 = tpu.concatenate %46, %50, %54, %58, %62, %66, %70, %74 in 0 : vector<1x128xf32>, vector<1x128xf32>, vector<1x128xf32>, vector<1x128xf32>, vector<1x128xf32>, vector<1x128xf32>, vector<1x128xf32>, vector<1x128xf32> -> vector<8x128xf32>
    %c0_25 = arith.constant 0 : index
    %c0_26 = arith.constant 0 : index
    %76 = vector.load %arg2[%c0_25, %c0_26] : memref<136x128xf32, #tpu.memory_space<vmem>>, vector<128x128xf32>
    %c128_27 = arith.constant 128 : index
    %c0_28 = arith.constant 0 : index
    %77 = vector.load %arg2[%c128_27, %c0_28] : memref<136x128xf32, #tpu.memory_space<vmem>>, vector<1x128xf32>
    %cst_29 = arith.constant dense<0.000000e+00> : vector<8x128xf32>
    %78 = tpu.matmul %75, %76, %cst_29 {dimension_numbers = #tpu.dot_dimension_numbers<[1], [0], [0], [1], [0, 0, 1, 1], [], []>} : vector<8x128xf32>, vector<128x128xf32>, vector<8x128xf32> -> vector<8x128xf32>
    %79 = vector.broadcast %77 : vector<1x128xf32> to vector<8x128xf32>
    %80 = arith.addf %78, %79 : vector<8x128xf32>
    %cst_30 = arith.constant dense<0xFF800000> : vector<8xf32>
    %81 = vector.multi_reduction <maximumf>, %80, %cst_30 [1] : vector<8x128xf32> to vector<8xf32>
    %82 = vector.shape_cast %81 : vector<8xf32> to vector<8x1xf32>
    %83 = vector.broadcast %82 : vector<8x1xf32> to vector<8x128xf32>
    %84 = arith.subf %80, %83 : vector<8x128xf32>
    %85 = math.exp %84 : vector<8x128xf32>
    %cst_31 = arith.constant dense<0.000000e+00> : vector<8xf32>
    %86 = vector.multi_reduction <add>, %85, %cst_31 [1] : vector<8x128xf32> to vector<8xf32>
    %87 = vector.shape_cast %86 : vector<8xf32> to vector<8x1xf32>
    %88 = math.log %87 : vector<8x1xf32>
    %89 = vector.broadcast %88 : vector<8x1xf32> to vector<8x128xf32>
    %90 = arith.subf %84, %89 : vector<8x128xf32>
    %c0_32 = arith.constant 0 : index
    %c0_33 = arith.constant 0 : index
    %91 = vector.load %arg3[%c0_32, %c0_33] : memref<8x128xf32, #tpu.memory_space<vmem>>, vector<8x128xf32>
    tpu.vector_store %arg3[%c0_32, %c0_33], %90 {strides = array<i32>} : memref<8x128xf32, #tpu.memory_space<vmem>>, vector<8x128xf32>,
    return
  }
}

</mosaic_0001>

<llo_original>
// kernel: tpu_custom_call.1
$region0: #{tpu_custom_call.1}
  #allocation0 [shape = 'u32[]', space=smem, size = 0x4, offset = 0x4, fixed_abs, tag = 'smem constant byte address 0x4 - core index']
  #allocation1 [shape = 'u32[144,128]{1,0:T(1,128)}', space=vmem, size = 0x12000, scoped, tag = 'internal scratch']
  %s0 = inlined_call_operand.hbm [shape: f32[8,128], index: 0, kind: input, shape index: {}]
  %s1 = inlined_call_operand.hbm [shape: f32[528,128], index: 1, kind: input, shape index: {}]
  %s2 = inlined_call_operand.hbm [shape: f32[136,128], index: 2, kind: input, shape index: {}]
  %s3 = inlined_call_operand.hbm [shape: f32[8,128], index: 3, kind: output, shape index: {}]
  %s4 = sld [smem:[#allocation0]]
  $region34: #{tpu_custom_call.1} parent=0
    _
  %s6 = ssub.s32 1, %s4
  %s7 = scalar_select 0, %s6, %s4
  $region1: #{tpu_custom_call.1} parent=0
    #allocation2 [shape = 'u8[4096]{0}', space=vmem, size = 0x1000, scoped, tag = 'input window, operand 0, single buffered']
    #allocation3 [shape = 's32[1]{0}', space=sflag, size = 0x4, scoped, tag = 'scoped memory for tpu_custom_call.1']
    #allocation4 [shape = 's32[1]{0}', space=sflag, size = 0x4, scoped, tag = 'scoped memory for tpu_custom_call.1']
    #allocation5 [shape = 'u8[270336]{0}', space=vmem, size = 0x42000, scoped, tag = 'input window, operand 1, single buffered']
    #allocation6 [shape = 's32[1]{0}', space=sflag, size = 0x4, scoped, tag = 'scoped memory for tpu_custom_call.1']
    #allocation7 [shape = 'u8[69632]{0}', space=vmem, size = 0x11000, scoped, tag = 'input window, operand 2, single buffered']
    #allocation8 [shape = 'u8[4096]{0}', space=vmem, size = 0x1000, scoped, tag = 'output window, operand 0, single buffered']
    %8 = vsyncpa [#allocation3], 0
    %9 = vsyncpa [#allocation6], 0
    %10 = vsyncpa [#allocation4], 0
    // Predicated region
    $region2: #{tpu_custom_call.1} parent=1 // pred_check
      _
    $region3: #{tpu_custom_call.1} parent=1 // pred_check_branch
      %12 = sbr.rel (0) target = $region5
    $region4: #{tpu_custom_call.1} parent=1 // pred_region
      %s14 = ssub.s32 128, 128
      %15 = vsyncadd [#allocation3], %s14
      %s17 = sshll.u32 [#allocation2], 4
      %s18 = int_to_ptr.vmem [resolvable:$true] %s17
      %20 = dma.hbm_to_vmem [thread:$0]  %s0, 128, %s18, [#allocation3]
    $region5: #{tpu_custom_call.1} parent=1 // pred_fallthru
      _
    // Predicated region
    $region6: #{tpu_custom_call.1} parent=1 // pred_check
      _
    $region7: #{tpu_custom_call.1} parent=1 // pred_check_branch
      %22 = sbr.rel (0) target = $region9
    $region8: #{tpu_custom_call.1} parent=1 // pred_region
      %s24 = ssub.s32 8448, 8448
      %25 = vsyncadd [#allocation6], %s24
      %s26 = sshll.u32 [#allocation5], 4
      %s27 = int_to_ptr.vmem [resolvable:$true] %s26
      %32 = dma.hbm_to_vmem [thread:$0]  %s1, 8448, %s27, [#allocation6], 128, 128, 8
    $region9: #{tpu_custom_call.1} parent=1 // pred_fallthru
      _
    // Predicated region
    $region10: #{tpu_custom_call.1} parent=1 // pred_check
      _
    $region11: #{tpu_custom_call.1} parent=1 // pred_check_branch
      %34 = sbr.rel (0) target = $region13
    $region12: #{tpu_custom_call.1} parent=1 // pred_region
      %s36 = ssub.s32 2176, 2176
      %37 = vsyncadd [#allocation6], %s36
      %s38 = sshll.u32 [#allocation7], 4
      %s39 = int_to_ptr.vmem [resolvable:$true] %s38
      %44 = dma.hbm_to_vmem [thread:$0]  %s2, 2176, %s39, [#allocation6], 128, 128, 8
    $region13: #{tpu_custom_call.1} parent=1 // pred_fallthru
      _
    // Predicated region
    $region14: #{tpu_custom_call.1} parent=1 // pred_check
      _
    $region15: #{tpu_custom_call.1} parent=1 // pred_check_branch
      %46 = sbr.rel (0) target = $region17
    $region16: #{tpu_custom_call.1} parent=1 // pred_region
      %47 = dma.done [#allocation3], 128
    $region17: #{tpu_custom_call.1} parent=1 // pred_fallthru
      _
    // Predicated region
    $region18: #{tpu_custom_call.1} parent=1 // pred_check
      _
    $region19: #{tpu_custom_call.1} parent=1 // pred_check_branch
      %49 = sbr.rel (0) target = $region21
    $region20: #{tpu_custom_call.1} parent=1 // pred_region
      %50 = dma.done [#allocation6], 8448
    $region21: #{tpu_custom_call.1} parent=1 // pred_fallthru
      _
    // Predicated region
    $region22: #{tpu_custom_call.1} parent=1 // pred_check
      _
    $region23: #{tpu_custom_call.1} parent=1 // pred_check_branch
      %52 = sbr.rel (0) target = $region25
    $region24: #{tpu_custom_call.1} parent=1 // pred_region
      %53 = dma.done [#allocation6], 2176
    $region25: #{tpu_custom_call.1} parent=1 // pred_fallthru
      _
    %v54 = vld [vmem:[#allocation5] sm:$0xff]
    %v55 = vld [vmem:[#allocation5 + $0x8] sm:$0xff]
    %v56 = vld [vmem:[#allocation5 + $0x10] sm:$0xff]
    %v57 = vld [vmem:[#allocation5 + $0x18] sm:$0xff]
    %v58 = vld [vmem:[#allocation5 + $0x20] sm:$0xff]
    %v59 = vld [vmem:[#allocation5 + $0x28] sm:$0xff]
    %v60 = vld [vmem:[#allocation5 + $0x30] sm:$0xff]
    %v61 = vld [vmem:[#allocation5 + $0x38] sm:$0xff]
    %v62 = vld [vmem:[#allocation5 + $0x40] sm:$0xff]
    %v63 = vld [vmem:[#allocation5 + $0x48] sm:$0xff]
    %v64 = vld [vmem:[#allocation5 + $0x50] sm:$0xff]
    %v65 = vld [vmem:[#allocation5 + $0x58] sm:$0xff]
    %v66 = vld [vmem:[#allocation5 + $0x60] sm:$0xff]
    %v67 = vld [vmem:[#allocation5 + $0x68] sm:$0xff]
    %v68 = vld [vmem:[#allocation5 + $0x70] sm:$0xff]
    %v69 = vld [vmem:[#allocation5 + $0x78] sm:$0xff]
    %v70 = vld [vmem:[#allocation5 + $0x80] sm:$0xff]
    %v71 = vld [vmem:[#allocation5 + $0x88] sm:$0xff]
    %v72 = vld [vmem:[#allocation5 + $0x90] sm:$0xff]
    %v73 = vld [vmem:[#allocation5 + $0x98] sm:$0xff]
    %v74 = vld [vmem:[#allocation5 + $0xa0] sm:$0xff]
    %v75 = vld [vmem:[#allocation5 + $0xa8] sm:$0xff]
    %v76 = vld [vmem:[#allocation5 + $0xb0] sm:$0xff]
    %v77 = vld [vmem:[#allocation5 + $0xb8] sm:$0xff]
    %v78 = vld [vmem:[#allocation5 + $0xc0] sm:$0xff]
    %v79 = vld [vmem:[#allocation5 + $0xc8] sm:$0xff]
    %v80 = vld [vmem:[#allocation5 + $0xd0] sm:$0xff]
    %v81 = vld [vmem:[#allocation5 + $0xd8] sm:$0xff]
    %v82 = vld [vmem:[#allocation5 + $0xe0] sm:$0xff]
    %v83 = vld [vmem:[#allocation5 + $0xe8] sm:$0xff]
    %v84 = vld [vmem:[#allocation5 + $0xf0] sm:$0xff]
    %v85 = vld [vmem:[#allocation5 + $0xf8] sm:$0xff]
    %v86 = vld [vmem:[#allocation5 + $0x100] sm:$0x1]
    %v87 = vld [vmem:[#allocation2] sm:$0xff]
    %v88 = vlaneseq
    %v89 = vshrl.u32 %v88, 7
    %v90 = vsub.s32 0, %v89
    %v91 = vrot.slane %v86, %v90
    %92 = vmatprep.subr.mxu0 0.0
    %93 = vmatpush1.msra.mxu0 %v69
    %94 = vmatprep.subr.mxu0 0.0
    %95 = vmatpush1.msra.mxu0 %v68
    %96 = vmatprep.subr.mxu0 0.0
    %97 = vmatpush1.msra.mxu0 %v67
    %98 = vmatprep.subr.mxu0 0.0
    %99 = vmatpush1.msra.mxu0 %v66
    %100 = vmatprep.subr.mxu0 0.0
    %101 = vmatpush1.msra.mxu0 %v65
    %102 = vmatprep.subr.mxu0 0.0
    %103 = vmatpush1.msra.mxu0 %v64
    %104 = vmatprep.subr.mxu0 0.0
    %105 = vmatpush1.msra.mxu0 %v63
    %106 = vmatprep.subr.mxu0 0.0
    %107 = vmatpush1.msra.mxu0 %v62
    %108 = vmatprep.subr.mxu0 0.0
    %109 = vmatpush1.msra.mxu0 %v61
    %110 = vmatprep.subr.mxu0 0.0
    %111 = vmatpush1.msra.mxu0 %v60
    %112 = vmatprep.subr.mxu0 0.0
    %113 = vmatpush1.msra.mxu0 %v59
    %114 = vmatprep.subr.mxu0 0.0
    %115 = vmatpush1.msra.mxu0 %v58
    %116 = vmatprep.subr.mxu0 0.0
    %117 = vmatpush1.msra.mxu0 %v57
    %118 = vmatprep.subr.mxu0 0.0
    %119 = vmatpush1.msra.mxu0 %v56
    %120 = vmatprep.subr.mxu0 0.0
    %121 = vmatpush1.msra.mxu0 %v55
    %122 = vmatprep.subr.mxu0 0.0
    %123 = vmatpush1.msra.mxu0 %v54
    %124 = vmatprep.subr.mxu0 0.0
    %125 = vmatpush2.msra.mxu0 0.0
    %126 = vmatprep.subr.mxu0 0.0
    %127 = vmatpush2.msra.mxu0 0.0
    %128 = vmatprep.subr.mxu0 0.0
    %129 = vmatpush2.msra.mxu0 0.0
    %130 = vmatprep.subr.mxu0 0.0
    %131 = vmatpush2.msra.mxu0 0.0
    %132 = vmatprep.subr.mxu0 0.0
    %133 = vmatpush2.msra.mxu0 0.0
    %134 = vmatprep.subr.mxu0 0.0
    %135 = vmatpush2.msra.mxu0 0.0
    %136 = vmatprep.subr.mxu0 0.0
    %137 = vmatpush2.msra.mxu0 0.0
    %138 = vmatprep.subr.mxu0 0.0
    %139 = vmatpush2.msra.mxu0 0.0
    %140 = vmatprep.subr.mxu0 0.0
    %141 = vmatpush2.msra.mxu0 0.0
    %142 = vmatprep.subr.mxu0 0.0
    %143 = vmatpush2.msra.mxu0 0.0
    %144 = vmatprep.subr.mxu0 0.0
    %145 = vmatpush2.msra.mxu0 0.0
    %146 = vmatprep.subr.mxu0 0.0
    %147 = vmatpush2.msra.mxu0 0.0
    %148 = vmatprep.subr.mxu0 0.0
    %149 = vmatpush2.msra.mxu0 0.0
    %150 = vmatprep.subr.mxu0 0.0
    %151 = vmatpush2.msra.mxu0 0.0
    %152 = vmatprep.subr.mxu0 0.0
    %153 = vmatpush2.msra.mxu0 0.0
    %154 = vmatprep.subr.mxu0 0.0
    %155 = vmatpush2.msra.mxu0 0.0
    %156 = vmatprep.mubr.f32.mxu0 0.0
    %157 = vmatmul.mubr.f32.gmra.mxu0 %v87
    %v158 = vpop.f32.mrf.mxu0
    %v159 = vadd.f32 %v91, %v158
    %v160 = vpop.f32.mrf.mxu0
    %161 = vdwg.mxu0
    %162 = vmatprep.subr.mxu0 0.0
    %163 = vmatpush1.msra.mxu0 %v85
    %164 = vmatprep.subr.mxu0 0.0
    %165 = vmatpush1.msra.mxu0 %v84
    %166 = vmatprep.subr.mxu0 0.0
    %167 = vmatpush1.msra.mxu0 %v83
    %168 = vmatprep.subr.mxu0 0.0
    %169 = vmatpush1.msra.mxu0 %v82
    %170 = vmatprep.subr.mxu0 0.0
    %171 = vmatpush1.msra.mxu0 %v81
    %172 = vmatprep.subr.mxu0 0.0
    %173 = vmatpush1.msra.mxu0 %v80
    %174 = vmatprep.subr.mxu0 0.0
    %175 = vmatpush1.msra.mxu0 %v79
    %176 = vmatprep.subr.mxu0 0.0
    %177 = vmatpush1.msra.mxu0 %v78
    %178 = vmatprep.subr.mxu0 0.0
    %179 = vmatpush1.msra.mxu0 %v77
    %180 = vmatprep.subr.mxu0 0.0
    %181 = vmatpush1.msra.mxu0 %v76
    %182 = vmatprep.subr.mxu0 0.0
    %183 = vmatpush1.msra.mxu0 %v75
    %184 = vmatprep.subr.mxu0 0.0
    %185 = vmatpush1.msra.mxu0 %v74
    %186 = vmatprep.subr.mxu0 0.0
    %187 = vmatpush1.msra.mxu0 %v73
    %188 = vmatprep.subr.mxu0 0.0
    %189 = vmatpush1.msra.mxu0 %v72
    %190 = vmatprep.subr.mxu0 0.0
    %191 = vmatpush1.msra.mxu0 %v71
    %192 = vmatprep.subr.mxu0 0.0
    %193 = vmatpush1.msra.mxu0 %v70
    %194 = vmatprep.subr.mxu0 0.0
    %195 = vmatpush2.msra.mxu0 0.0
    %196 = vmatprep.subr.mxu0 0.0
    %197 = vmatpush2.msra.mxu0 0.0
    %198 = vmatprep.subr.mxu0 0.0
    %199 = vmatpush2.msra.mxu0 0.0
    %200 = vmatprep.subr.mxu0 0.0
    %201 = vmatpush2.msra.mxu0 0.0
    %202 = vmatprep.subr.mxu0 0.0
    %203 = vmatpush2.msra.mxu0 0.0
    %204 = vmatprep.subr.mxu0 0.0
    %205 = vmatpush2.msra.mxu0 0.0
    %206 = vmatprep.subr.mxu0 0.0
    %207 = vmatpush2.msra.mxu0 0.0
    %208 = vmatprep.subr.mxu0 0.0
    %209 = vmatpush2.msra.mxu0 0.0
    %210 = vmatprep.subr.mxu0 0.0
    %211 = vmatpush2.msra.mxu0 0.0
    %212 = vmatprep.subr.mxu0 0.0
    %213 = vmatpush2.msra.mxu0 0.0
    %214 = vmatprep.subr.mxu0 0.0
    %215 = vmatpush2.msra.mxu0 0.0
    %216 = vmatprep.subr.mxu0 0.0
    %217 = vmatpush2.msra.mxu0 0.0
    %218 = vmatprep.subr.mxu0 0.0
    %219 = vmatpush2.msra.mxu0 0.0
    %220 = vmatprep.subr.mxu0 0.0
    %221 = vmatpush2.msra.mxu0 0.0
    %222 = vmatprep.subr.mxu0 0.0
    %223 = vmatpush2.msra.mxu0 0.0
    %224 = vmatprep.subr.mxu0 0.0
    %225 = vmatpush2.msra.mxu0 0.0
    %226 = vmatprep.mubr.f32.mxu0 0.0
    %227 = vmatmul.mubr.f32.gmra.mxu0 0.0
    %v228 = vpop.f32.mrf.mxu0
    %v229 = vadd.f32 0.0, %v228
    %v230 = vpop.f32.mrf.mxu0
    %231 = vdwg.mxu0
    %v232 = vadd.f32 %v159, %v229
    %v233 = vtanh.pop %v232
    %234 = vmatprep.subr.mxu0 0.0
    %235 = vmatpush1.msra.mxu0 %v85
    %236 = vmatprep.subr.mxu0 0.0
    %237 = vmatpush1.msra.mxu0 %v84
    %238 = vmatprep.subr.mxu0 0.0
    %239 = vmatpush1.msra.mxu0 %v83
    %240 = vmatprep.subr.mxu0 0.0
    %241 = vmatpush1.msra.mxu0 %v82
    %242 = vmatprep.subr.mxu0 0.0
    %243 = vmatpush1.msra.mxu0 %v81
    %244 = vmatprep.subr.mxu0 0.0
    %245 = vmatpush1.msra.mxu0 %v80
    %246 = vmatprep.subr.mxu0 0.0
    %247 = vmatpush1.msra.mxu0 %v79
    %248 = vmatprep.subr.mxu0 0.0
    %249 = vmatpush1.msra.mxu0 %v78
    %250 = vmatprep.subr.mxu0 0.0
    %251 = vmatpush1.msra.mxu0 %v77
    %252 = vmatprep.subr.mxu0 0.0
    %253 = vmatpush1.msra.mxu0 %v76
    %254 = vmatprep.subr.mxu0 0.0
    %255 = vmatpush1.msra.mxu0 %v75
    %256 = vmatprep.subr.mxu0 0.0
    %257 = vmatpush1.msra.mxu0 %v74
    %258 = vmatprep.subr.mxu0 0.0
    %259 = vmatpush1.msra.mxu0 %v73
    %260 = vmatprep.subr.mxu0 0.0
    %261 = vmatpush1.msra.mxu0 %v72
    %262 = vmatprep.subr.mxu0 0.0
    %263 = vmatpush1.msra.mxu0 %v71
    %264 = vmatprep.subr.mxu0 0.0
    %265 = vmatpush1.msra.mxu0 %v70
    %266 = vmatprep.subr.mxu0 0.0
    %267 = vmatpush2.msra.mxu0 0.0
    %268 = vmatprep.subr.mxu0 0.0
    %269 = vmatpush2.msra.mxu0 0.0
    %270 = vmatprep.subr.mxu0 0.0
    %271 = vmatpush2.msra.mxu0 0.0
    %272 = vmatprep.subr.mxu0 0.0
    %273 = vmatpush2.msra.mxu0 0.0
    %274 = vmatprep.subr.mxu0 0.0
    %275 = vmatpush2.msra.mxu0 0.0
    %276 = vmatprep.subr.mxu0 0.0
    %277 = vmatpush2.msra.mxu0 0.0
    %278 = vmatprep.subr.mxu0 0.0
    %279 = vmatpush2.msra.mxu0 0.0
    %280 = vmatprep.subr.mxu0 0.0
    %281 = vmatpush2.msra.mxu0 0.0
    %282 = vmatprep.subr.mxu0 0.0
    %283 = vmatpush2.msra.mxu0 0.0
    %284 = vmatprep.subr.mxu0 0.0
    %285 = vmatpush2.msra.mxu0 0.0
    %286 = vmatprep.subr.mxu0 0.0
    %287 = vmatpush2.msra.mxu0 0.0
    %288 = vmatprep.subr.mxu0 0.0
    %289 = vmatpush2.msra.mxu0 0.0
    %290 = vmatprep.subr.mxu0 0.0
    %291 = vmatpush2.msra.mxu0 0.0
    %292 = vmatprep.subr.mxu0 0.0
    %293 = vmatpush2.msra.mxu0 0.0
    %294 = vmatprep.subr.mxu0 0.0
    %295 = vmatpush2.msra.mxu0 0.0
    %296 = vmatprep.subr.mxu0 0.0
    %297 = vmatpush2.msra.mxu0 0.0
    %298 = vmatprep.mubr.f32.mxu0 0.0
    %299 = vmatmul.mubr.f32.gmra.mxu0 %v233
    %v300 = vpop.f32.mrf.mxu0
    %v301 = vadd.f32 0.0, %v300
    %v302 = vpop.f32.mrf.mxu0
    %303 = vdwg.mxu0
    %v305 = vrot.slane %v301, 7
    %v307 = vadd.f32 %v159, %v305
    %v308 = vtanh.pop %v307
    %v310 = vrot.slane %v308, 1
    %312 = vmatprep.subr.mxu0 0.0
    %313 = vmatpush1.msra.mxu0 %v85
    %314 = vmatprep.subr.mxu0 0.0
    %315 = vmatpush1.msra.mxu0 %v84
    %316 = vmatprep.subr.mxu0 0.0
    %317 = vmatpush1.msra.mxu0 %v83
    %318 = vmatprep.subr.mxu0 0.0
    %319 = vmatpush1.msra.mxu0 %v82
    %320 = vmatprep.subr.mxu0 0.0
    %321 = vmatpush1.msra.mxu0 %v81
    %322 = vmatprep.subr.mxu0 0.0
    %323 = vmatpush1.msra.mxu0 %v80
    %324 = vmatprep.subr.mxu0 0.0
    %325 = vmatpush1.msra.mxu0 %v79
    %326 = vmatprep.subr.mxu0 0.0
    %327 = vmatpush1.msra.mxu0 %v78
    %328 = vmatprep.subr.mxu0 0.0
    %329 = vmatpush1.msra.mxu0 %v77
    %330 = vmatprep.subr.mxu0 0.0
    %331 = vmatpush1.msra.mxu0 %v76
    %332 = vmatprep.subr.mxu0 0.0
    %333 = vmatpush1.msra.mxu0 %v75
    %334 = vmatprep.subr.mxu0 0.0
    %335 = vmatpush1.msra.mxu0 %v74
    %336 = vmatprep.subr.mxu0 0.0
    %337 = vmatpush1.msra.mxu0 %v73
    %338 = vmatprep.subr.mxu0 0.0
    %339 = vmatpush1.msra.mxu0 %v72
    %340 = vmatprep.subr.mxu0 0.0
    %341 = vmatpush1.msra.mxu0 %v71
    %342 = vmatprep.subr.mxu0 0.0
    %343 = vmatpush1.msra.mxu0 %v70
    %344 = vmatprep.subr.mxu0 0.0
    %345 = vmatpush2.msra.mxu0 0.0
    %346 = vmatprep.subr.mxu0 0.0
    %347 = vmatpush2.msra.mxu0 0.0
    %348 = vmatprep.subr.mxu0 0.0
    %349 = vmatpush2.msra.mxu0 0.0
    %350 = vmatprep.subr.mxu0 0.0
    %351 = vmatpush2.msra.mxu0 0.0
    %352 = vmatprep.subr.mxu0 0.0
    %353 = vmatpush2.msra.mxu0 0.0
    %354 = vmatprep.subr.mxu0 0.0
    %355 = vmatpush2.msra.mxu0 0.0
    %356 = vmatprep.subr.mxu0 0.0
    %357 = vmatpush2.msra.mxu0 0.0
    %358 = vmatprep.subr.mxu0 0.0
    %359 = vmatpush2.msra.mxu0 0.0
    %360 = vmatprep.subr.mxu0 0.0
    %361 = vmatpush2.msra.mxu0 0.0
    %362 = vmatprep.subr.mxu0 0.0
    %363 = vmatpush2.msra.mxu0 0.0
    %364 = vmatprep.subr.mxu0 0.0
    %365 = vmatpush2.msra.mxu0 0.0
    %366 = vmatprep.subr.mxu0 0.0
    %367 = vmatpush2.msra.mxu0 0.0
    %368 = vmatprep.subr.mxu0 0.0
    %369 = vmatpush2.msra.mxu0 0.0
    %370 = vmatprep.subr.mxu0 0.0
    %371 = vmatpush2.msra.mxu0 0.0
    %372 = vmatprep.subr.mxu0 0.0
    %373 = vmatpush2.msra.mxu0 0.0
    %374 = vmatprep.subr.mxu0 0.0
    %375 = vmatpush2.msra.mxu0 0.0
    %376 = vmatprep.mubr.f32.mxu0 0.0
    %377 = vmatmul.mubr.f32.gmra.mxu0 %v310
    %v378 = vpop.f32.mrf.mxu0
    %v379 = vadd.f32 0.0, %v378
    %v380 = vpop.f32.mrf.mxu0
    %381 = vdwg.mxu0
    %v383 = vrot.slane %v379, 6
    %v385 = vadd.f32 %v159, %v383
    %v386 = vtanh.pop %v385
    %v388 = vrot.slane %v386, 2
    %390 = vmatprep.subr.mxu0 0.0
    %391 = vmatpush1.msra.mxu0 %v85
    %392 = vmatprep.subr.mxu0 0.0
    %393 = vmatpush1.msra.mxu0 %v84
    %394 = vmatprep.subr.mxu0 0.0
    %395 = vmatpush1.msra.mxu0 %v83
    %396 = vmatprep.subr.mxu0 0.0
    %397 = vmatpush1.msra.mxu0 %v82
    %398 = vmatprep.subr.mxu0 0.0
    %399 = vmatpush1.msra.mxu0 %v81
    %400 = vmatprep.subr.mxu0 0.0
    %401 = vmatpush1.msra.mxu0 %v80
    %402 = vmatprep.subr.mxu0 0.0
    %403 = vmatpush1.msra.mxu0 %v79
    %404 = vmatprep.subr.mxu0 0.0
    %405 = vmatpush1.msra.mxu0 %v78
    %406 = vmatprep.subr.mxu0 0.0
    %407 = vmatpush1.msra.mxu0 %v77
    %408 = vmatprep.subr.mxu0 0.0
    %409 = vmatpush1.msra.mxu0 %v76
    %410 = vmatprep.subr.mxu0 0.0
    %411 = vmatpush1.msra.mxu0 %v75
    %412 = vmatprep.subr.mxu0 0.0
    %413 = vmatpush1.msra.mxu0 %v74
    %414 = vmatprep.subr.mxu0 0.0
    %415 = vmatpush1.msra.mxu0 %v73
    %416 = vmatprep.subr.mxu0 0.0
    %417 = vmatpush1.msra.mxu0 %v72
    %418 = vmatprep.subr.mxu0 0.0
    %419 = vmatpush1.msra.mxu0 %v71
    %420 = vmatprep.subr.mxu0 0.0
    %421 = vmatpush1.msra.mxu0 %v70
    %422 = vmatprep.subr.mxu0 0.0
    %423 = vmatpush2.msra.mxu0 0.0
    %424 = vmatprep.subr.mxu0 0.0
    %425 = vmatpush2.msra.mxu0 0.0
    %426 = vmatprep.subr.mxu0 0.0
    %427 = vmatpush2.msra.mxu0 0.0
    %428 = vmatprep.subr.mxu0 0.0
    %429 = vmatpush2.msra.mxu0 0.0
    %430 = vmatprep.subr.mxu0 0.0
    %431 = vmatpush2.msra.mxu0 0.0
    %432 = vmatprep.subr.mxu0 0.0
    %433 = vmatpush2.msra.mxu0 0.0
    %434 = vmatprep.subr.mxu0 0.0
    %435 = vmatpush2.msra.mxu0 0.0
    %436 = vmatprep.subr.mxu0 0.0
    %437 = vmatpush2.msra.mxu0 0.0
    %438 = vmatprep.subr.mxu0 0.0
    %439 = vmatpush2.msra.mxu0 0.0
    %440 = vmatprep.subr.mxu0 0.0
    %441 = vmatpush2.msra.mxu0 0.0
    %442 = vmatprep.subr.mxu0 0.0
    %443 = vmatpush2.msra.mxu0 0.0
    %444 = vmatprep.subr.mxu0 0.0
    %445 = vmatpush2.msra.mxu0 0.0
    %446 = vmatprep.subr.mxu0 0.0
    %447 = vmatpush2.msra.mxu0 0.0
    %448 = vmatprep.subr.mxu0 0.0
    %449 = vmatpush2.msra.mxu0 0.0
    %450 = vmatprep.subr.mxu0 0.0
    %451 = vmatpush2.msra.mxu0 0.0
    %452 = vmatprep.subr.mxu0 0.0
    %453 = vmatpush2.msra.mxu0 0.0
    %454 = vmatprep.mubr.f32.mxu0 0.0
    %455 = vmatmul.mubr.f32.gmra.mxu0 %v388
    %v456 = vpop.f32.mrf.mxu0
    %v457 = vadd.f32 0.0, %v456
    %v458 = vpop.f32.mrf.mxu0
    %459 = vdwg.mxu0
    %v461 = vrot.slane %v457, 5
    %v463 = vadd.f32 %v159, %v461
    %v464 = vtanh.pop %v463
    %v466 = vrot.slane %v464, 3
    %468 = vmatprep.subr.mxu0 0.0
    %469 = vmatpush1.msra.mxu0 %v85
    %470 = vmatprep.subr.mxu0 0.0
    %471 = vmatpush1.msra.mxu0 %v84
    %472 = vmatprep.subr.mxu0 0.0
    %473 = vmatpush1.msra.mxu0 %v83
    %474 = vmatprep.subr.mxu0 0.0
    %475 = vmatpush1.msra.mxu0 %v82
    %476 = vmatprep.subr.mxu0 0.0
    %477 = vmatpush1.msra.mxu0 %v81
    %478 = vmatprep.subr.mxu0 0.0
    %479 = vmatpush1.msra.mxu0 %v80
    %480 = vmatprep.subr.mxu0 0.0
    %481 = vmatpush1.msra.mxu0 %v79
    %482 = vmatprep.subr.mxu0 0.0
    %483 = vmatpush1.msra.mxu0 %v78
    %484 = vmatprep.subr.mxu0 0.0
    %485 = vmatpush1.msra.mxu0 %v77
    %486 = vmatprep.subr.mxu0 0.0
    %487 = vmatpush1.msra.mxu0 %v76
    %488 = vmatprep.subr.mxu0 0.0
    %489 = vmatpush1.msra.mxu0 %v75
    %490 = vmatprep.subr.mxu0 0.0
    %491 = vmatpush1.msra.mxu0 %v74
    %492 = vmatprep.subr.mxu0 0.0
    %493 = vmatpush1.msra.mxu0 %v73
    %494 = vmatprep.subr.mxu0 0.0
    %495 = vmatpush1.msra.mxu0 %v72
    %496 = vmatprep.subr.mxu0 0.0
    %497 = vmatpush1.msra.mxu0 %v71
    %498 = vmatprep.subr.mxu0 0.0
    %499 = vmatpush1.msra.mxu0 %v70
    %500 = vmatprep.subr.mxu0 0.0
    %501 = vmatpush2.msra.mxu0 0.0
    %502 = vmatprep.subr.mxu0 0.0
    %503 = vmatpush2.msra.mxu0 0.0
    %504 = vmatprep.subr.mxu0 0.0
    %505 = vmatpush2.msra.mxu0 0.0
    %506 = vmatprep.subr.mxu0 0.0
    %507 = vmatpush2.msra.mxu0 0.0
    %508 = vmatprep.subr.mxu0 0.0
    %509 = vmatpush2.msra.mxu0 0.0
    %510 = vmatprep.subr.mxu0 0.0
    %511 = vmatpush2.msra.mxu0 0.0
    %512 = vmatprep.subr.mxu0 0.0
    %513 = vmatpush2.msra.mxu0 0.0
    %514 = vmatprep.subr.mxu0 0.0
    %515 = vmatpush2.msra.mxu0 0.0
    %516 = vmatprep.subr.mxu0 0.0
    %517 = vmatpush2.msra.mxu0 0.0
    %518 = vmatprep.subr.mxu0 0.0
    %519 = vmatpush2.msra.mxu0 0.0
    %520 = vmatprep.subr.mxu0 0.0
    %521 = vmatpush2.msra.mxu0 0.0
    %522 = vmatprep.subr.mxu0 0.0
    %523 = vmatpush2.msra.mxu0 0.0
    %524 = vmatprep.subr.mxu0 0.0
    %525 = vmatpush2.msra.mxu0 0.0
    %526 = vmatprep.subr.mxu0 0.0
    %527 = vmatpush2.msra.mxu0 0.0
    %528 = vmatprep.subr.mxu0 0.0
    %529 = vmatpush2.msra.mxu0 0.0
    %530 = vmatprep.subr.mxu0 0.0
    %531 = vmatpush2.msra.mxu0 0.0
    %532 = vmatprep.mubr.f32.mxu0 0.0
    %533 = vmatmul.mubr.f32.gmra.mxu0 %v466
    %v534 = vpop.f32.mrf.mxu0
    %v535 = vadd.f32 0.0, %v534
    %v536 = vpop.f32.mrf.mxu0
    %537 = vdwg.mxu0
    %v539 = vrot.slane %v535, 4
    %v541 = vadd.f32 %v159, %v539
    %v542 = vtanh.pop %v541
    %v544 = vrot.slane %v542, 4
    %546 = vmatprep.subr.mxu0 0.0
    %547 = vmatpush1.msra.mxu0 %v85
    %548 = vmatprep.subr.mxu0 0.0
    %549 = vmatpush1.msra.mxu0 %v84
    %550 = vmatprep.subr.mxu0 0.0
    %551 = vmatpush1.msra.mxu0 %v83
    %552 = vmatprep.subr.mxu0 0.0
    %553 = vmatpush1.msra.mxu0 %v82
    %554 = vmatprep.subr.mxu0 0.0
    %555 = vmatpush1.msra.mxu0 %v81
    %556 = vmatprep.subr.mxu0 0.0
    %557 = vmatpush1.msra.mxu0 %v80
    %558 = vmatprep.subr.mxu0 0.0
    %559 = vmatpush1.msra.mxu0 %v79
    %560 = vmatprep.subr.mxu0 0.0
    %561 = vmatpush1.msra.mxu0 %v78
    %562 = vmatprep.subr.mxu0 0.0
    %563 = vmatpush1.msra.mxu0 %v77
    %564 = vmatprep.subr.mxu0 0.0
    %565 = vmatpush1.msra.mxu0 %v76
    %566 = vmatprep.subr.mxu0 0.0
    %567 = vmatpush1.msra.mxu0 %v75
    %568 = vmatprep.subr.mxu0 0.0
    %569 = vmatpush1.msra.mxu0 %v74
    %570 = vmatprep.subr.mxu0 0.0
    %571 = vmatpush1.msra.mxu0 %v73
    %572 = vmatprep.subr.mxu0 0.0
    %573 = vmatpush1.msra.mxu0 %v72
    %574 = vmatprep.subr.mxu0 0.0
    %575 = vmatpush1.msra.mxu0 %v71
    %576 = vmatprep.subr.mxu0 0.0
    %577 = vmatpush1.msra.mxu0 %v70
    %578 = vmatprep.subr.mxu0 0.0
    %579 = vmatpush2.msra.mxu0 0.0
    %580 = vmatprep.subr.mxu0 0.0
    %581 = vmatpush2.msra.mxu0 0.0
    %582 = vmatprep.subr.mxu0 0.0
    %583 = vmatpush2.msra.mxu0 0.0
    %584 = vmatprep.subr.mxu0 0.0
    %585 = vmatpush2.msra.mxu0 0.0
    %586 = vmatprep.subr.mxu0 0.0
    %587 = vmatpush2.msra.mxu0 0.0
    %588 = vmatprep.subr.mxu0 0.0
    %589 = vmatpush2.msra.mxu0 0.0
    %590 = vmatprep.subr.mxu0 0.0
    %591 = vmatpush2.msra.mxu0 0.0
    %592 = vmatprep.subr.mxu0 0.0
    %593 = vmatpush2.msra.mxu0 0.0
    %594 = vmatprep.subr.mxu0 0.0
    %595 = vmatpush2.msra.mxu0 0.0
    %596 = vmatprep.subr.mxu0 0.0
    %597 = vmatpush2.msra.mxu0 0.0
    %598 = vmatprep.subr.mxu0 0.0
    %599 = vmatpush2.msra.mxu0 0.0
    %600 = vmatprep.subr.mxu0 0.0
    %601 = vmatpush2.msra.mxu0 0.0
    %602 = vmatprep.subr.mxu0 0.0
    %603 = vmatpush2.msra.mxu0 0.0
    %604 = vmatprep.subr.mxu0 0.0
    %605 = vmatpush2.msra.mxu0 0.0
    %606 = vmatprep.subr.mxu0 0.0
    %607 = vmatpush2.msra.mxu0 0.0
    %608 = vmatprep.subr.mxu0 0.0
    %609 = vmatpush2.msra.mxu0 0.0
    %610 = vmatprep.mubr.f32.mxu0 0.0
    %611 = vmatmul.mubr.f32.gmra.mxu0 %v544
    %v612 = vpop.f32.mrf.mxu0
    %v613 = vadd.f32 0.0, %v612
    %v614 = vpop.f32.mrf.mxu0
    %615 = vdwg.mxu0
    %v617 = vrot.slane %v613, 3
    %v619 = vadd.f32 %v159, %v617
    %v620 = vtanh.pop %v619
    %v622 = vrot.slane %v620, 5
    %624 = vmatprep.subr.mxu0 0.0
    %625 = vmatpush1.msra.mxu0 %v85
    %626 = vmatprep.subr.mxu0 0.0
    %627 = vmatpush1.msra.mxu0 %v84
    %628 = vmatprep.subr.mxu0 0.0
    %629 = vmatpush1.msra.mxu0 %v83
    %630 = vmatprep.subr.mxu0 0.0
    %631 = vmatpush1.msra.mxu0 %v82
    %632 = vmatprep.subr.mxu0 0.0
    %633 = vmatpush1.msra.mxu0 %v81
    %634 = vmatprep.subr.mxu0 0.0
    %635 = vmatpush1.msra.mxu0 %v80
    %636 = vmatprep.subr.mxu0 0.0
    %637 = vmatpush1.msra.mxu0 %v79
    %638 = vmatprep.subr.mxu0 0.0
    %639 = vmatpush1.msra.mxu0 %v78
    %640 = vmatprep.subr.mxu0 0.0
    %641 = vmatpush1.msra.mxu0 %v77
    %642 = vmatprep.subr.mxu0 0.0
    %643 = vmatpush1.msra.mxu0 %v76
    %644 = vmatprep.subr.mxu0 0.0
    %645 = vmatpush1.msra.mxu0 %v75
    %646 = vmatprep.subr.mxu0 0.0
    %647 = vmatpush1.msra.mxu0 %v74
    %648 = vmatprep.subr.mxu0 0.0
    %649 = vmatpush1.msra.mxu0 %v73
    %650 = vmatprep.subr.mxu0 0.0
    %651 = vmatpush1.msra.mxu0 %v72
    %652 = vmatprep.subr.mxu0 0.0
    %653 = vmatpush1.msra.mxu0 %v71
    %654 = vmatprep.subr.mxu0 0.0
    %655 = vmatpush1.msra.mxu0 %v70
    %656 = vmatprep.subr.mxu0 0.0
    %657 = vmatpush2.msra.mxu0 0.0
    %658 = vmatprep.subr.mxu0 0.0
    %659 = vmatpush2.msra.mxu0 0.0
    %660 = vmatprep.subr.mxu0 0.0
    %661 = vmatpush2.msra.mxu0 0.0
    %662 = vmatprep.subr.mxu0 0.0
    %663 = vmatpush2.msra.mxu0 0.0
    %664 = vmatprep.subr.mxu0 0.0
    %665 = vmatpush2.msra.mxu0 0.0
    %666 = vmatprep.subr.mxu0 0.0
    %667 = vmatpush2.msra.mxu0 0.0
    %668 = vmatprep.subr.mxu0 0.0
    %669 = vmatpush2.msra.mxu0 0.0
    %670 = vmatprep.subr.mxu0 0.0
    %671 = vmatpush2.msra.mxu0 0.0
    %672 = vmatprep.subr.mxu0 0.0
    %673 = vmatpush2.msra.mxu0 0.0
    %674 = vmatprep.subr.mxu0 0.0
    %675 = vmatpush2.msra.mxu0 0.0
    %676 = vmatprep.subr.mxu0 0.0
    %677 = vmatpush2.msra.mxu0 0.0
    %678 = vmatprep.subr.mxu0 0.0
    %679 = vmatpush2.msra.mxu0 0.0
    %680 = vmatprep.subr.mxu0 0.0
    %681 = vmatpush2.msra.mxu0 0.0
    %682 = vmatprep.subr.mxu0 0.0
    %683 = vmatpush2.msra.mxu0 0.0
    %684 = vmatprep.subr.mxu0 0.0
    %685 = vmatpush2.msra.mxu0 0.0
    %686 = vmatprep.subr.mxu0 0.0
    %687 = vmatpush2.msra.mxu0 0.0
    %688 = vmatprep.mubr.f32.mxu0 0.0
    %689 = vmatmul.mubr.f32.gmra.mxu0 %v622
    %v690 = vpop.f32.mrf.mxu0
    %v691 = vadd.f32 0.0, %v690
    %v692 = vpop.f32.mrf.mxu0
    %693 = vdwg.mxu0
    %v695 = vrot.slane %v691, 2
    %v697 = vadd.f32 %v159, %v695
    %v698 = vtanh.pop %v697
    %v700 = vrot.slane %v698, 6
    %702 = vmatprep.subr.mxu0 0.0
    %703 = vmatpush1.msra.mxu0 %v85
    %704 = vmatprep.subr.mxu0 0.0
    %705 = vmatpush1.msra.mxu0 %v84
    %706 = vmatprep.subr.mxu0 0.0
    %707 = vmatpush1.msra.mxu0 %v83
    %708 = vmatprep.subr.mxu0 0.0
    %709 = vmatpush1.msra.mxu0 %v82
    %710 = vmatprep.subr.mxu0 0.0
    %711 = vmatpush1.msra.mxu0 %v81
    %712 = vmatprep.subr.mxu0 0.0
    %713 = vmatpush1.msra.mxu0 %v80
    %714 = vmatprep.subr.mxu0 0.0
    %715 = vmatpush1.msra.mxu0 %v79
    %716 = vmatprep.subr.mxu0 0.0
    %717 = vmatpush1.msra.mxu0 %v78
    %718 = vmatprep.subr.mxu0 0.0
    %719 = vmatpush1.msra.mxu0 %v77
    %720 = vmatprep.subr.mxu0 0.0
    %721 = vmatpush1.msra.mxu0 %v76
    %722 = vmatprep.subr.mxu0 0.0
    %723 = vmatpush1.msra.mxu0 %v75
    %724 = vmatprep.subr.mxu0 0.0
    %725 = vmatpush1.msra.mxu0 %v74
    %726 = vmatprep.subr.mxu0 0.0
    %727 = vmatpush1.msra.mxu0 %v73
    %728 = vmatprep.subr.mxu0 0.0
    %729 = vmatpush1.msra.mxu0 %v72
    %730 = vmatprep.subr.mxu0 0.0
    %731 = vmatpush1.msra.mxu0 %v71
    %732 = vmatprep.subr.mxu0 0.0
    %733 = vmatpush1.msra.mxu0 %v70
    %734 = vmatprep.subr.mxu0 0.0
    %735 = vmatpush2.msra.mxu0 0.0
    %736 = vmatprep.subr.mxu0 0.0
    %737 = vmatpush2.msra.mxu0 0.0
    %738 = vmatprep.subr.mxu0 0.0
    %739 = vmatpush2.msra.mxu0 0.0
    %740 = vmatprep.subr.mxu0 0.0
    %741 = vmatpush2.msra.mxu0 0.0
    %742 = vmatprep.subr.mxu0 0.0
    %743 = vmatpush2.msra.mxu0 0.0
    %744 = vmatprep.subr.mxu0 0.0
    %745 = vmatpush2.msra.mxu0 0.0
    %746 = vmatprep.subr.mxu0 0.0
    %747 = vmatpush2.msra.mxu0 0.0
    %748 = vmatprep.subr.mxu0 0.0
    %749 = vmatpush2.msra.mxu0 0.0
    %750 = vmatprep.subr.mxu0 0.0
    %751 = vmatpush2.msra.mxu0 0.0
    %752 = vmatprep.subr.mxu0 0.0
    %753 = vmatpush2.msra.mxu0 0.0
    %754 = vmatprep.subr.mxu0 0.0
    %755 = vmatpush2.msra.mxu0 0.0
    %756 = vmatprep.subr.mxu0 0.0
    %757 = vmatpush2.msra.mxu0 0.0
    %758 = vmatprep.subr.mxu0 0.0
    %759 = vmatpush2.msra.mxu0 0.0
    %760 = vmatprep.subr.mxu0 0.0
    %761 = vmatpush2.msra.mxu0 0.0
    %762 = vmatprep.subr.mxu0 0.0
    %763 = vmatpush2.msra.mxu0 0.0
    %764 = vmatprep.subr.mxu0 0.0
    %765 = vmatpush2.msra.mxu0 0.0
    %766 = vmatprep.mubr.f32.mxu0 0.0
    %767 = vmatmul.mubr.f32.gmra.mxu0 %v700
    %v768 = vpop.f32.mrf.mxu0
    %v769 = vadd.f32 0.0, %v768
    %v770 = vpop.f32.mrf.mxu0
    %771 = vdwg.mxu0
    %v773 = vrot.slane %v769, 1
    %v775 = vadd.f32 %v159, %v773
    %v776 = vtanh.pop %v775
    %v777 = vld [vmem:[#allocation5 + $0x108] sm:$0xff]
    %v778 = vld [vmem:[#allocation5 + $0x110] sm:$0xff]
    %v779 = vld [vmem:[#allocation5 + $0x118] sm:$0xff]
    %v780 = vld [vmem:[#allocation5 + $0x120] sm:$0xff]
    %v781 = vld [vmem:[#allocation5 + $0x128] sm:$0xff]
    %v782 = vld [vmem:[#allocation5 + $0x130] sm:$0xff]
    %v783 = vld [vmem:[#allocation5 + $0x138] sm:$0xff]
    %v784 = vld [vmem:[#allocation5 + $0x140] sm:$0xff]
    %v785 = vld [vmem:[#allocation5 + $0x148] sm:$0xff]
    %v786 = vld [vmem:[#allocation5 + $0x150] sm:$0xff]
    %v787 = vld [vmem:[#allocation5 + $0x158] sm:$0xff]
    %v788 = vld [vmem:[#allocation5 + $0x160] sm:$0xff]
    %v789 = vld [vmem:[#allocation5 + $0x168] sm:$0xff]
    %v790 = vld [vmem:[#allocation5 + $0x170] sm:$0xff]
    %v791 = vld [vmem:[#allocation5 + $0x178] sm:$0xff]
    %v792 = vld [vmem:[#allocation5 + $0x180] sm:$0xff]
    %v793 = vld [vmem:[#allocation5 + $0x188] sm:$0xff]
    %v794 = vld [vmem:[#allocation5 + $0x190] sm:$0xff]
    %v795 = vld [vmem:[#allocation5 + $0x198] sm:$0xff]
    %v796 = vld [vmem:[#allocation5 + $0x1a0] sm:$0xff]
    %v797 = vld [vmem:[#allocation5 + $0x1a8] sm:$0xff]
    %v798 = vld [vmem:[#allocation5 + $0x1b0] sm:$0xff]
    %v799 = vld [vmem:[#allocation5 + $0x1b8] sm:$0xff]
    %v800 = vld [vmem:[#allocation5 + $0x1c0] sm:$0xff]
    %v801 = vld [vmem:[#allocation5 + $0x1c8] sm:$0xff]
    %v802 = vld [vmem:[#allocation5 + $0x1d0] sm:$0xff]
    %v803 = vld [vmem:[#allocation5 + $0x1d8] sm:$0xff]
    %v804 = vld [vmem:[#allocation5 + $0x1e0] sm:$0xff]
    %v805 = vld [vmem:[#allocation5 + $0x1e8] sm:$0xff]
    %v806 = vld [vmem:[#allocation5 + $0x1f0] sm:$0xff]
    %v807 = vld [vmem:[#allocation5 + $0x1f8] sm:$0xff]
    %v808 = vld [vmem:[#allocation5 + $0x200] sm:$0xff]
    %v809 = vld [vmem:[#allocation5 + $0x208] sm:$0x1]
    %810 = vmatprep.subr.mxu0 0.0
    %811 = vmatpush1.msra.mxu0 %v792
    %812 = vmatprep.subr.mxu0 0.0
    %813 = vmatpush1.msra.mxu0 %v791
    %814 = vmatprep.subr.mxu0 0.0
    %815 = vmatpush1.msra.mxu0 %v790
    %816 = vmatprep.subr.mxu0 0.0
    %817 = vmatpush1.msra.mxu0 %v789
    %818 = vmatprep.subr.mxu0 0.0
    %819 = vmatpush1.msra.mxu0 %v788
    %820 = vmatprep.subr.mxu0 0.0
    %821 = vmatpush1.msra.mxu0 %v787
    %822 = vmatprep.subr.mxu0 0.0
    %823 = vmatpush1.msra.mxu0 %v786
    %824 = vmatprep.subr.mxu0 0.0
    %825 = vmatpush1.msra.mxu0 %v785
    %826 = vmatprep.subr.mxu0 0.0
    %827 = vmatpush1.msra.mxu0 %v784
    %828 = vmatprep.subr.mxu0 0.0
    %829 = vmatpush1.msra.mxu0 %v783
    %830 = vmatprep.subr.mxu0 0.0
    %831 = vmatpush1.msra.mxu0 %v782
    %832 = vmatprep.subr.mxu0 0.0
    %833 = vmatpush1.msra.mxu0 %v781
    %834 = vmatprep.subr.mxu0 0.0
    %835 = vmatpush1.msra.mxu0 %v780
    %836 = vmatprep.subr.mxu0 0.0
    %837 = vmatpush1.msra.mxu0 %v779
    %838 = vmatprep.subr.mxu0 0.0
    %839 = vmatpush1.msra.mxu0 %v778
    %840 = vmatprep.subr.mxu0 0.0
    %841 = vmatpush1.msra.mxu0 %v777
    %842 = vmatprep.subr.mxu0 0.0
    %843 = vmatpush2.msra.mxu0 %v808
    %844 = vmatprep.subr.mxu0 0.0
    %845 = vmatpush2.msra.mxu0 %v807
    %846 = vmatprep.subr.mxu0 0.0
    %847 = vmatpush2.msra.mxu0 %v806
    %848 = vmatprep.subr.mxu0 0.0
    %849 = vmatpush2.msra.mxu0 %v805
    %850 = vmatprep.subr.mxu0 0.0
    %851 = vmatpush2.msra.mxu0 %v804
    %852 = vmatprep.subr.mxu0 0.0
    %853 = vmatpush2.msra.mxu0 %v803
    %854 = vmatprep.subr.mxu0 0.0
    %855 = vmatpush2.msra.mxu0 %v802
    %856 = vmatprep.subr.mxu0 0.0
    %857 = vmatpush2.msra.mxu0 %v801
    %858 = vmatprep.subr.mxu0 0.0
    %859 = vmatpush2.msra.mxu0 %v800
    %860 = vmatprep.subr.mxu0 0.0
    %861 = vmatpush2.msra.mxu0 %v799
    %862 = vmatprep.subr.mxu0 0.0
    %863 = vmatpush2.msra.mxu0 %v798
    %864 = vmatprep.subr.mxu0 0.0
    %865 = vmatpush2.msra.mxu0 %v797
    %866 = vmatprep.subr.mxu0 0.0
    %867 = vmatpush2.msra.mxu0 %v796
    %868 = vmatprep.subr.mxu0 0.0
    %869 = vmatpush2.msra.mxu0 %v795
    %870 = vmatprep.subr.mxu0 0.0
    %871 = vmatpush2.msra.mxu0 %v794
    %872 = vmatprep.subr.mxu0 0.0
    %873 = vmatpush2.msra.mxu0 %v793
    %874 = vmatprep.mubr.f32.mxu0 0.0
    %875 = vmatmul.mubr.f32.gmra.mxu0 %v233
    %v876 = vpop.f32.mrf.mxu0
    %v877 = vadd.f32 %v809, %v876
    %v878 = vpop.f32.mrf.mxu0
    %879 = vdwg.mxu0
    %v880 = vtanh.pop %v877
    %v882 = vrot.slane %v880, 7
    %v883 = vrot.slane %v882, 1
    %885 = vmatprep.subr.mxu0 0.0
    %886 = vmatpush1.msra.mxu0 %v792
    %887 = vmatprep.subr.mxu0 0.0
    %888 = vmatpush1.msra.mxu0 %v791
    %889 = vmatprep.subr.mxu0 0.0
    %890 = vmatpush1.msra.mxu0 %v790
    %891 = vmatprep.subr.mxu0 0.0
    %892 = vmatpush1.msra.mxu0 %v789
    %893 = vmatprep.subr.mxu0 0.0
    %894 = vmatpush1.msra.mxu0 %v788
    %895 = vmatprep.subr.mxu0 0.0
    %896 = vmatpush1.msra.mxu0 %v787
    %897 = vmatprep.subr.mxu0 0.0
    %898 = vmatpush1.msra.mxu0 %v786
    %899 = vmatprep.subr.mxu0 0.0
    %900 = vmatpush1.msra.mxu0 %v785
    %901 = vmatprep.subr.mxu0 0.0
    %902 = vmatpush1.msra.mxu0 %v784
    %903 = vmatprep.subr.mxu0 0.0
    %904 = vmatpush1.msra.mxu0 %v783
    %905 = vmatprep.subr.mxu0 0.0
    %906 = vmatpush1.msra.mxu0 %v782
    %907 = vmatprep.subr.mxu0 0.0
    %908 = vmatpush1.msra.mxu0 %v781
    %909 = vmatprep.subr.mxu0 0.0
    %910 = vmatpush1.msra.mxu0 %v780
    %911 = vmatprep.subr.mxu0 0.0
    %912 = vmatpush1.msra.mxu0 %v779
    %913 = vmatprep.subr.mxu0 0.0
    %914 = vmatpush1.msra.mxu0 %v778
    %915 = vmatprep.subr.mxu0 0.0
    %916 = vmatpush1.msra.mxu0 %v777
    %917 = vmatprep.subr.mxu0 0.0
    %918 = vmatpush2.msra.mxu0 %v808
    %919 = vmatprep.subr.mxu0 0.0
    %920 = vmatpush2.msra.mxu0 %v807
    %921 = vmatprep.subr.mxu0 0.0
    %922 = vmatpush2.msra.mxu0 %v806
    %923 = vmatprep.subr.mxu0 0.0
    %924 = vmatpush2.msra.mxu0 %v805
    %925 = vmatprep.subr.mxu0 0.0
    %926 = vmatpush2.msra.mxu0 %v804
    %927 = vmatprep.subr.mxu0 0.0
    %928 = vmatpush2.msra.mxu0 %v803
    %929 = vmatprep.subr.mxu0 0.0
    %930 = vmatpush2.msra.mxu0 %v802
    %931 = vmatprep.subr.mxu0 0.0
    %932 = vmatpush2.msra.mxu0 %v801
    %933 = vmatprep.subr.mxu0 0.0
    %934 = vmatpush2.msra.mxu0 %v800
    %935 = vmatprep.subr.mxu0 0.0
    %936 = vmatpush2.msra.mxu0 %v799
    %937 = vmatprep.subr.mxu0 0.0
    %938 = vmatpush2.msra.mxu0 %v798
    %939 = vmatprep.subr.mxu0 0.0
    %940 = vmatpush2.msra.mxu0 %v797
    %941 = vmatprep.subr.mxu0 0.0
    %942 = vmatpush2.msra.mxu0 %v796
    %943 = vmatprep.subr.mxu0 0.0
    %944 = vmatpush2.msra.mxu0 %v795
    %945 = vmatprep.subr.mxu0 0.0
    %946 = vmatpush2.msra.mxu0 %v794
    %947 = vmatprep.subr.mxu0 0.0
    %948 = vmatpush2.msra.mxu0 %v793
    %949 = vmatprep.mubr.f32.mxu0 %v883
    %950 = vmatmul.mubr.f32.gmra.mxu0 %v310
    %v951 = vpop.f32.mrf.mxu0
    %v952 = vadd.f32 %v809, %v951
    %v953 = vpop.f32.mrf.mxu0
    %954 = vdwg.mxu0
    %v955 = vtanh.pop %v952
    %v957 = vrot.slane %v955, 6
    %v958 = vrot.slane %v957, 2
    %960 = vmatprep.subr.mxu0 0.0
    %961 = vmatpush1.msra.mxu0 %v792
    %962 = vmatprep.subr.mxu0 0.0
    %963 = vmatpush1.msra.mxu0 %v791
    %964 = vmatprep.subr.mxu0 0.0
    %965 = vmatpush1.msra.mxu0 %v790
    %966 = vmatprep.subr.mxu0 0.0
    %967 = vmatpush1.msra.mxu0 %v789
    %968 = vmatprep.subr.mxu0 0.0
    %969 = vmatpush1.msra.mxu0 %v788
    %970 = vmatprep.subr.mxu0 0.0
    %971 = vmatpush1.msra.mxu0 %v787
    %972 = vmatprep.subr.mxu0 0.0
    %973 = vmatpush1.msra.mxu0 %v786
    %974 = vmatprep.subr.mxu0 0.0
    %975 = vmatpush1.msra.mxu0 %v785
    %976 = vmatprep.subr.mxu0 0.0
    %977 = vmatpush1.msra.mxu0 %v784
    %978 = vmatprep.subr.mxu0 0.0
    %979 = vmatpush1.msra.mxu0 %v783
    %980 = vmatprep.subr.mxu0 0.0
    %981 = vmatpush1.msra.mxu0 %v782
    %982 = vmatprep.subr.mxu0 0.0
    %983 = vmatpush1.msra.mxu0 %v781
    %984 = vmatprep.subr.mxu0 0.0
    %985 = vmatpush1.msra.mxu0 %v780
    %986 = vmatprep.subr.mxu0 0.0
    %987 = vmatpush1.msra.mxu0 %v779
    %988 = vmatprep.subr.mxu0 0.0
    %989 = vmatpush1.msra.mxu0 %v778
    %990 = vmatprep.subr.mxu0 0.0
    %991 = vmatpush1.msra.mxu0 %v777
    %992 = vmatprep.subr.mxu0 0.0
    %993 = vmatpush2.msra.mxu0 %v808
    %994 = vmatprep.subr.mxu0 0.0
    %995 = vmatpush2.msra.mxu0 %v807
    %996 = vmatprep.subr.mxu0 0.0
    %997 = vmatpush2.msra.mxu0 %v806
    %998 = vmatprep.subr.mxu0 0.0
    %999 = vmatpush2.msra.mxu0 %v805
    %1000 = vmatprep.subr.mxu0 0.0
    %1001 = vmatpush2.msra.mxu0 %v804
    %1002 = vmatprep.subr.mxu0 0.0
    %1003 = vmatpush2.msra.mxu0 %v803
    %1004 = vmatprep.subr.mxu0 0.0
    %1005 = vmatpush2.msra.mxu0 %v802
    %1006 = vmatprep.subr.mxu0 0.0
    %1007 = vmatpush2.msra.mxu0 %v801
    %1008 = vmatprep.subr.mxu0 0.0
    %1009 = vmatpush2.msra.mxu0 %v800
    %1010 = vmatprep.subr.mxu0 0.0
    %1011 = vmatpush2.msra.mxu0 %v799
    %1012 = vmatprep.subr.mxu0 0.0
    %1013 = vmatpush2.msra.mxu0 %v798
    %1014 = vmatprep.subr.mxu0 0.0
    %1015 = vmatpush2.msra.mxu0 %v797
    %1016 = vmatprep.subr.mxu0 0.0
    %1017 = vmatpush2.msra.mxu0 %v796
    %1018 = vmatprep.subr.mxu0 0.0
    %1019 = vmatpush2.msra.mxu0 %v795
    %1020 = vmatprep.subr.mxu0 0.0
    %1021 = vmatpush2.msra.mxu0 %v794
    %1022 = vmatprep.subr.mxu0 0.0
    %1023 = vmatpush2.msra.mxu0 %v793
    %1024 = vmatprep.mubr.f32.mxu0 %v958
    %1025 = vmatmul.mubr.f32.gmra.mxu0 %v388
    %v1026 = vpop.f32.mrf.mxu0
    %v1027 = vadd.f32 %v809, %v1026
    %v1028 = vpop.f32.mrf.mxu0
    %1029 = vdwg.mxu0
    %v1030 = vtanh.pop %v1027
    %v1032 = vrot.slane %v1030, 5
    %v1033 = vrot.slane %v1032, 3
    %1035 = vmatprep.subr.mxu0 0.0
    %1036 = vmatpush1.msra.mxu0 %v792
    %1037 = vmatprep.subr.mxu0 0.0
    %1038 = vmatpush1.msra.mxu0 %v791
    %1039 = vmatprep.subr.mxu0 0.0
    %1040 = vmatpush1.msra.mxu0 %v790
    %1041 = vmatprep.subr.mxu0 0.0
    %1042 = vmatpush1.msra.mxu0 %v789
    %1043 = vmatprep.subr.mxu0 0.0
    %1044 = vmatpush1.msra.mxu0 %v788
    %1045 = vmatprep.subr.mxu0 0.0
    %1046 = vmatpush1.msra.mxu0 %v787
    %1047 = vmatprep.subr.mxu0 0.0
    %1048 = vmatpush1.msra.mxu0 %v786
    %1049 = vmatprep.subr.mxu0 0.0
    %1050 = vmatpush1.msra.mxu0 %v785
    %1051 = vmatprep.subr.mxu0 0.0
    %1052 = vmatpush1.msra.mxu0 %v784
    %1053 = vmatprep.subr.mxu0 0.0
    %1054 = vmatpush1.msra.mxu0 %v783
    %1055 = vmatprep.subr.mxu0 0.0
    %1056 = vmatpush1.msra.mxu0 %v782
    %1057 = vmatprep.subr.mxu0 0.0
    %1058 = vmatpush1.msra.mxu0 %v781
    %1059 = vmatprep.subr.mxu0 0.0
    %1060 = vmatpush1.msra.mxu0 %v780
    %1061 = vmatprep.subr.mxu0 0.0
    %1062 = vmatpush1.msra.mxu0 %v779
    %1063 = vmatprep.subr.mxu0 0.0
    %1064 = vmatpush1.msra.mxu0 %v778
    %1065 = vmatprep.subr.mxu0 0.0
    %1066 = vmatpush1.msra.mxu0 %v777
    %1067 = vmatprep.subr.mxu0 0.0
    %1068 = vmatpush2.msra.mxu0 %v808
    %1069 = vmatprep.subr.mxu0 0.0
    %1070 = vmatpush2.msra.mxu0 %v807
    %1071 = vmatprep.subr.mxu0 0.0
    %1072 = vmatpush2.msra.mxu0 %v806
    %1073 = vmatprep.subr.mxu0 0.0
    %1074 = vmatpush2.msra.mxu0 %v805
    %1075 = vmatprep.subr.mxu0 0.0
    %1076 = vmatpush2.msra.mxu0 %v804
    %1077 = vmatprep.subr.mxu0 0.0
    %1078 = vmatpush2.msra.mxu0 %v803
    %1079 = vmatprep.subr.mxu0 0.0
    %1080 = vmatpush2.msra.mxu0 %v802
    %1081 = vmatprep.subr.mxu0 0.0
    %1082 = vmatpush2.msra.mxu0 %v801
    %1083 = vmatprep.subr.mxu0 0.0
    %1084 = vmatpush2.msra.mxu0 %v800
    %1085 = vmatprep.subr.mxu0 0.0
    %1086 = vmatpush2.msra.mxu0 %v799
    %1087 = vmatprep.subr.mxu0 0.0
    %1088 = vmatpush2.msra.mxu0 %v798
    %1089 = vmatprep.subr.mxu0 0.0
    %1090 = vmatpush2.msra.mxu0 %v797
    %1091 = vmatprep.subr.mxu0 0.0
    %1092 = vmatpush2.msra.mxu0 %v796
    %1093 = vmatprep.subr.mxu0 0.0
    %1094 = vmatpush2.msra.mxu0 %v795
    %1095 = vmatprep.subr.mxu0 0.0
    %1096 = vmatpush2.msra.mxu0 %v794
    %1097 = vmatprep.subr.mxu0 0.0
    %1098 = vmatpush2.msra.mxu0 %v793
    %1099 = vmatprep.mubr.f32.mxu0 %v1033
    %1100 = vmatmul.mubr.f32.gmra.mxu0 %v466
    %v1101 = vpop.f32.mrf.mxu0
    %v1102 = vadd.f32 %v809, %v1101
    %v1103 = vpop.f32.mrf.mxu0
    %1104 = vdwg.mxu0
    %v1105 = vtanh.pop %v1102
    %v1107 = vrot.slane %v1105, 4
    %v1108 = vrot.slane %v1107, 4
    %1110 = vmatprep.subr.mxu0 0.0
    %1111 = vmatpush1.msra.mxu0 %v792
    %1112 = vmatprep.subr.mxu0 0.0
    %1113 = vmatpush1.msra.mxu0 %v791
    %1114 = vmatprep.subr.mxu0 0.0
    %1115 = vmatpush1.msra.mxu0 %v790
    %1116 = vmatprep.subr.mxu0 0.0
    %1117 = vmatpush1.msra.mxu0 %v789
    %1118 = vmatprep.subr.mxu0 0.0
    %1119 = vmatpush1.msra.mxu0 %v788
    %1120 = vmatprep.subr.mxu0 0.0
    %1121 = vmatpush1.msra.mxu0 %v787
    %1122 = vmatprep.subr.mxu0 0.0
    %1123 = vmatpush1.msra.mxu0 %v786
    %1124 = vmatprep.subr.mxu0 0.0
    %1125 = vmatpush1.msra.mxu0 %v785
    %1126 = vmatprep.subr.mxu0 0.0
    %1127 = vmatpush1.msra.mxu0 %v784
    %1128 = vmatprep.subr.mxu0 0.0
    %1129 = vmatpush1.msra.mxu0 %v783
    %1130 = vmatprep.subr.mxu0 0.0
    %1131 = vmatpush1.msra.mxu0 %v782
    %1132 = vmatprep.subr.mxu0 0.0
    %1133 = vmatpush1.msra.mxu0 %v781
    %1134 = vmatprep.subr.mxu0 0.0
    %1135 = vmatpush1.msra.mxu0 %v780
    %1136 = vmatprep.subr.mxu0 0.0
    %1137 = vmatpush1.msra.mxu0 %v779
    %1138 = vmatprep.subr.mxu0 0.0
    %1139 = vmatpush1.msra.mxu0 %v778
    %1140 = vmatprep.subr.mxu0 0.0
    %1141 = vmatpush1.msra.mxu0 %v777
    %1142 = vmatprep.subr.mxu0 0.0
    %1143 = vmatpush2.msra.mxu0 %v808
    %1144 = vmatprep.subr.mxu0 0.0
    %1145 = vmatpush2.msra.mxu0 %v807
    %1146 = vmatprep.subr.mxu0 0.0
    %1147 = vmatpush2.msra.mxu0 %v806
    %1148 = vmatprep.subr.mxu0 0.0
    %1149 = vmatpush2.msra.mxu0 %v805
    %1150 = vmatprep.subr.mxu0 0.0
    %1151 = vmatpush2.msra.mxu0 %v804
    %1152 = vmatprep.subr.mxu0 0.0
    %1153 = vmatpush2.msra.mxu0 %v803
    %1154 = vmatprep.subr.mxu0 0.0
    %1155 = vmatpush2.msra.mxu0 %v802
    %1156 = vmatprep.subr.mxu0 0.0
    %1157 = vmatpush2.msra.mxu0 %v801
    %1158 = vmatprep.subr.mxu0 0.0
    %1159 = vmatpush2.msra.mxu0 %v800
    %1160 = vmatprep.subr.mxu0 0.0
    %1161 = vmatpush2.msra.mxu0 %v799
    %1162 = vmatprep.subr.mxu0 0.0
    %1163 = vmatpush2.msra.mxu0 %v798
    %1164 = vmatprep.subr.mxu0 0.0
    %1165 = vmatpush2.msra.mxu0 %v797
    %1166 = vmatprep.subr.mxu0 0.0
    %1167 = vmatpush2.msra.mxu0 %v796
    %1168 = vmatprep.subr.mxu0 0.0
    %1169 = vmatpush2.msra.mxu0 %v795
    %1170 = vmatprep.subr.mxu0 0.0
    %1171 = vmatpush2.msra.mxu0 %v794
    %1172 = vmatprep.subr.mxu0 0.0
    %1173 = vmatpush2.msra.mxu0 %v793
    %1174 = vmatprep.mubr.f32.mxu0 %v1108
    %1175 = vmatmul.mubr.f32.gmra.mxu0 %v544
    %v1176 = vpop.f32.mrf.mxu0
    %v1177 = vadd.f32 %v809, %v1176
    %v1178 = vpop.f32.mrf.mxu0
    %1179 = vdwg.mxu0
    %v1180 = vtanh.pop %v1177
    %v1182 = vrot.slane %v1180, 3
    %v1183 = vrot.slane %v1182, 5
    %1185 = vmatprep.subr.mxu0 0.0
    %1186 = vmatpush1.msra.mxu0 %v792
    %1187 = vmatprep.subr.mxu0 0.0
    %1188 = vmatpush1.msra.mxu0 %v791
    %1189 = vmatprep.subr.mxu0 0.0
    %1190 = vmatpush1.msra.mxu0 %v790
    %1191 = vmatprep.subr.mxu0 0.0
    %1192 = vmatpush1.msra.mxu0 %v789
    %1193 = vmatprep.subr.mxu0 0.0
    %1194 = vmatpush1.msra.mxu0 %v788
    %1195 = vmatprep.subr.mxu0 0.0
    %1196 = vmatpush1.msra.mxu0 %v787
    %1197 = vmatprep.subr.mxu0 0.0
    %1198 = vmatpush1.msra.mxu0 %v786
    %1199 = vmatprep.subr.mxu0 0.0
    %1200 = vmatpush1.msra.mxu0 %v785
    %1201 = vmatprep.subr.mxu0 0.0
    %1202 = vmatpush1.msra.mxu0 %v784
    %1203 = vmatprep.subr.mxu0 0.0
    %1204 = vmatpush1.msra.mxu0 %v783
    %1205 = vmatprep.subr.mxu0 0.0
    %1206 = vmatpush1.msra.mxu0 %v782
    %1207 = vmatprep.subr.mxu0 0.0
    %1208 = vmatpush1.msra.mxu0 %v781
    %1209 = vmatprep.subr.mxu0 0.0
    %1210 = vmatpush1.msra.mxu0 %v780
    %1211 = vmatprep.subr.mxu0 0.0
    %1212 = vmatpush1.msra.mxu0 %v779
    %1213 = vmatprep.subr.mxu0 0.0
    %1214 = vmatpush1.msra.mxu0 %v778
    %1215 = vmatprep.subr.mxu0 0.0
    %1216 = vmatpush1.msra.mxu0 %v777
    %1217 = vmatprep.subr.mxu0 0.0
    %1218 = vmatpush2.msra.mxu0 %v808
    %1219 = vmatprep.subr.mxu0 0.0
    %1220 = vmatpush2.msra.mxu0 %v807
    %1221 = vmatprep.subr.mxu0 0.0
    %1222 = vmatpush2.msra.mxu0 %v806
    %1223 = vmatprep.subr.mxu0 0.0
    %1224 = vmatpush2.msra.mxu0 %v805
    %1225 = vmatprep.subr.mxu0 0.0
    %1226 = vmatpush2.msra.mxu0 %v804
    %1227 = vmatprep.subr.mxu0 0.0
    %1228 = vmatpush2.msra.mxu0 %v803
    %1229 = vmatprep.subr.mxu0 0.0
    %1230 = vmatpush2.msra.mxu0 %v802
    %1231 = vmatprep.subr.mxu0 0.0
    %1232 = vmatpush2.msra.mxu0 %v801
    %1233 = vmatprep.subr.mxu0 0.0
    %1234 = vmatpush2.msra.mxu0 %v800
    %1235 = vmatprep.subr.mxu0 0.0
    %1236 = vmatpush2.msra.mxu0 %v799
    %1237 = vmatprep.subr.mxu0 0.0
    %1238 = vmatpush2.msra.mxu0 %v798
    %1239 = vmatprep.subr.mxu0 0.0
    %1240 = vmatpush2.msra.mxu0 %v797
    %1241 = vmatprep.subr.mxu0 0.0
    %1242 = vmatpush2.msra.mxu0 %v796
    %1243 = vmatprep.subr.mxu0 0.0
    %1244 = vmatpush2.msra.mxu0 %v795
    %1245 = vmatprep.subr.mxu0 0.0
    %1246 = vmatpush2.msra.mxu0 %v794
    %1247 = vmatprep.subr.mxu0 0.0
    %1248 = vmatpush2.msra.mxu0 %v793
    %1249 = vmatprep.mubr.f32.mxu0 %v1183
    %1250 = vmatmul.mubr.f32.gmra.mxu0 %v622
    %v1251 = vpop.f32.mrf.mxu0
    %v1252 = vadd.f32 %v809, %v1251
    %v1253 = vpop.f32.mrf.mxu0
    %1254 = vdwg.mxu0
    %v1255 = vtanh.pop %v1252
    %v1257 = vrot.slane %v1255, 2
    %v1258 = vrot.slane %v1257, 6
    %1260 = vmatprep.subr.mxu0 0.0
    %1261 = vmatpush1.msra.mxu0 %v792
    %1262 = vmatprep.subr.mxu0 0.0
    %1263 = vmatpush1.msra.mxu0 %v791
    %1264 = vmatprep.subr.mxu0 0.0
    %1265 = vmatpush1.msra.mxu0 %v790
    %1266 = vmatprep.subr.mxu0 0.0
    %1267 = vmatpush1.msra.mxu0 %v789
    %1268 = vmatprep.subr.mxu0 0.0
    %1269 = vmatpush1.msra.mxu0 %v788
    %1270 = vmatprep.subr.mxu0 0.0
    %1271 = vmatpush1.msra.mxu0 %v787
    %1272 = vmatprep.subr.mxu0 0.0
    %1273 = vmatpush1.msra.mxu0 %v786
    %1274 = vmatprep.subr.mxu0 0.0
    %1275 = vmatpush1.msra.mxu0 %v785
    %1276 = vmatprep.subr.mxu0 0.0
    %1277 = vmatpush1.msra.mxu0 %v784
    %1278 = vmatprep.subr.mxu0 0.0
    %1279 = vmatpush1.msra.mxu0 %v783
    %1280 = vmatprep.subr.mxu0 0.0
    %1281 = vmatpush1.msra.mxu0 %v782
    %1282 = vmatprep.subr.mxu0 0.0
    %1283 = vmatpush1.msra.mxu0 %v781
    %1284 = vmatprep.subr.mxu0 0.0
    %1285 = vmatpush1.msra.mxu0 %v780
    %1286 = vmatprep.subr.mxu0 0.0
    %1287 = vmatpush1.msra.mxu0 %v779
    %1288 = vmatprep.subr.mxu0 0.0
    %1289 = vmatpush1.msra.mxu0 %v778
    %1290 = vmatprep.subr.mxu0 0.0
    %1291 = vmatpush1.msra.mxu0 %v777
    %1292 = vmatprep.subr.mxu0 0.0
    %1293 = vmatpush2.msra.mxu0 %v808
    %1294 = vmatprep.subr.mxu0 0.0
    %1295 = vmatpush2.msra.mxu0 %v807
    %1296 = vmatprep.subr.mxu0 0.0
    %1297 = vmatpush2.msra.mxu0 %v806
    %1298 = vmatprep.subr.mxu0 0.0
    %1299 = vmatpush2.msra.mxu0 %v805
    %1300 = vmatprep.subr.mxu0 0.0
    %1301 = vmatpush2.msra.mxu0 %v804
    %1302 = vmatprep.subr.mxu0 0.0
    %1303 = vmatpush2.msra.mxu0 %v803
    %1304 = vmatprep.subr.mxu0 0.0
    %1305 = vmatpush2.msra.mxu0 %v802
    %1306 = vmatprep.subr.mxu0 0.0
    %1307 = vmatpush2.msra.mxu0 %v801
    %1308 = vmatprep.subr.mxu0 0.0
    %1309 = vmatpush2.msra.mxu0 %v800
    %1310 = vmatprep.subr.mxu0 0.0
    %1311 = vmatpush2.msra.mxu0 %v799
    %1312 = vmatprep.subr.mxu0 0.0
    %1313 = vmatpush2.msra.mxu0 %v798
    %1314 = vmatprep.subr.mxu0 0.0
    %1315 = vmatpush2.msra.mxu0 %v797
    %1316 = vmatprep.subr.mxu0 0.0
    %1317 = vmatpush2.msra.mxu0 %v796
    %1318 = vmatprep.subr.mxu0 0.0
    %1319 = vmatpush2.msra.mxu0 %v795
    %1320 = vmatprep.subr.mxu0 0.0
    %1321 = vmatpush2.msra.mxu0 %v794
    %1322 = vmatprep.subr.mxu0 0.0
    %1323 = vmatpush2.msra.mxu0 %v793
    %1324 = vmatprep.mubr.f32.mxu0 %v1258
    %1325 = vmatmul.mubr.f32.gmra.mxu0 %v700
    %v1326 = vpop.f32.mrf.mxu0
    %v1327 = vadd.f32 %v809, %v1326
    %v1328 = vpop.f32.mrf.mxu0
    %1329 = vdwg.mxu0
    %v1330 = vtanh.pop %v1327
    %v1332 = vrot.slane %v1330, 1
    %v1334 = vrot.slane %v776, 7
    %v1335 = vrot.slane %v1332, 7
    %1338 = vmatprep.subr.mxu0 0.0
    %1339 = vmatpush1.msra.mxu0 %v792
    %1340 = vmatprep.subr.mxu0 0.0
    %1341 = vmatpush1.msra.mxu0 %v791
    %1342 = vmatprep.subr.mxu0 0.0
    %1343 = vmatpush1.msra.mxu0 %v790
    %1344 = vmatprep.subr.mxu0 0.0
    %1345 = vmatpush1.msra.mxu0 %v789
    %1346 = vmatprep.subr.mxu0 0.0
    %1347 = vmatpush1.msra.mxu0 %v788
    %1348 = vmatprep.subr.mxu0 0.0
    %1349 = vmatpush1.msra.mxu0 %v787
    %1350 = vmatprep.subr.mxu0 0.0
    %1351 = vmatpush1.msra.mxu0 %v786
    %1352 = vmatprep.subr.mxu0 0.0
    %1353 = vmatpush1.msra.mxu0 %v785
    %1354 = vmatprep.subr.mxu0 0.0
    %1355 = vmatpush1.msra.mxu0 %v784
    %1356 = vmatprep.subr.mxu0 0.0
    %1357 = vmatpush1.msra.mxu0 %v783
    %1358 = vmatprep.subr.mxu0 0.0
    %1359 = vmatpush1.msra.mxu0 %v782
    %1360 = vmatprep.subr.mxu0 0.0
    %1361 = vmatpush1.msra.mxu0 %v781
    %1362 = vmatprep.subr.mxu0 0.0
    %1363 = vmatpush1.msra.mxu0 %v780
    %1364 = vmatprep.subr.mxu0 0.0
    %1365 = vmatpush1.msra.mxu0 %v779
    %1366 = vmatprep.subr.mxu0 0.0
    %1367 = vmatpush1.msra.mxu0 %v778
    %1368 = vmatprep.subr.mxu0 0.0
    %1369 = vmatpush1.msra.mxu0 %v777
    %1370 = vmatprep.subr.mxu0 0.0
    %1371 = vmatpush2.msra.mxu0 %v808
    %1372 = vmatprep.subr.mxu0 0.0
    %1373 = vmatpush2.msra.mxu0 %v807
    %1374 = vmatprep.subr.mxu0 0.0
    %1375 = vmatpush2.msra.mxu0 %v806
    %1376 = vmatprep.subr.mxu0 0.0
    %1377 = vmatpush2.msra.mxu0 %v805
    %1378 = vmatprep.subr.mxu0 0.0
    %1379 = vmatpush2.msra.mxu0 %v804
    %1380 = vmatprep.subr.mxu0 0.0
    %1381 = vmatpush2.msra.mxu0 %v803
    %1382 = vmatprep.subr.mxu0 0.0
    %1383 = vmatpush2.msra.mxu0 %v802
    %1384 = vmatprep.subr.mxu0 0.0
    %1385 = vmatpush2.msra.mxu0 %v801
    %1386 = vmatprep.subr.mxu0 0.0
    %1387 = vmatpush2.msra.mxu0 %v800
    %1388 = vmatprep.subr.mxu0 0.0
    %1389 = vmatpush2.msra.mxu0 %v799
    %1390 = vmatprep.subr.mxu0 0.0
    %1391 = vmatpush2.msra.mxu0 %v798
    %1392 = vmatprep.subr.mxu0 0.0
    %1393 = vmatpush2.msra.mxu0 %v797
    %1394 = vmatprep.subr.mxu0 0.0
    %1395 = vmatpush2.msra.mxu0 %v796
    %1396 = vmatprep.subr.mxu0 0.0
    %1397 = vmatpush2.msra.mxu0 %v795
    %1398 = vmatprep.subr.mxu0 0.0
    %1399 = vmatpush2.msra.mxu0 %v794
    %1400 = vmatprep.subr.mxu0 0.0
    %1401 = vmatpush2.msra.mxu0 %v793
    %1402 = vmatprep.mubr.f32.mxu0 %v1335
    %1403 = vmatmul.mubr.f32.gmra.mxu0 %v1334
    %v1404 = vpop.f32.mrf.mxu0
    %v1405 = vadd.f32 %v809, %v1404
    %v1406 = vpop.f32.mrf.mxu0
    %1407 = vdwg.mxu0
    %v1408 = vtanh.pop %v1405
    %v1409 = vrot.slane %v955, 7
    %v1411 = vrot.slane %v1030, 6
    %v1413 = vrot.slane %v1105, 5
    %v1415 = vrot.slane %v1180, 4
    %v1417 = vrot.slane %v1255, 3
    %v1419 = vrot.slane %v1330, 2
    %v1422 = vrot.slane %v1408, 1
    %vm1424 = vcmask 1040384
    %v1425 = vsel %vm1424, %v880, %v1409
    %vm1426 = vcmask 1041408
    %v1427 = vsel %vm1426, %v1425, %v1411
    %vm1428 = vcmask 1042432
    %v1429 = vsel %vm1428, %v1427, %v1413
    %vm1430 = vcmask 1043456
    %v1431 = vsel %vm1430, %v1429, %v1415
    %vm1432 = vcmask 1044480
    %v1433 = vsel %vm1432, %v1431, %v1417
    %vm1434 = vcmask 1045504
    %v1435 = vsel %vm1434, %v1433, %v1419
    %vm1436 = vcmask 1046528
    %v1437 = vsel %vm1436, %v1435, %v1422
    %v1438 = vld [vmem:[#allocation7] sm:$0xff]
    %v1439 = vld [vmem:[#allocation7 + $0x8] sm:$0xff]
    %v1440 = vld [vmem:[#allocation7 + $0x10] sm:$0xff]
    %v1441 = vld [vmem:[#allocation7 + $0x18] sm:$0xff]
    %v1442 = vld [vmem:[#allocation7 + $0x20] sm:$0xff]
    %v1443 = vld [vmem:[#allocation7 + $0x28] sm:$0xff]
    %v1444 = vld [vmem:[#allocation7 + $0x30] sm:$0xff]
    %v1445 = vld [vmem:[#allocation7 + $0x38] sm:$0xff]
    %v1446 = vld [vmem:[#allocation7 + $0x40] sm:$0xff]
    %v1447 = vld [vmem:[#allocation7 + $0x48] sm:$0xff]
    %v1448 = vld [vmem:[#allocation7 + $0x50] sm:$0xff]
    %v1449 = vld [vmem:[#allocation7 + $0x58] sm:$0xff]
    %v1450 = vld [vmem:[#allocation7 + $0x60] sm:$0xff]
    %v1451 = vld [vmem:[#allocation7 + $0x68] sm:$0xff]
    %v1452 = vld [vmem:[#allocation7 + $0x70] sm:$0xff]
    %v1453 = vld [vmem:[#allocation7 + $0x78] sm:$0xff]
    %v1454 = vld [vmem:[#allocation7 + $0x80] sm:$0x1]
    %v1455 = vlaneseq
    %v1456 = vshrl.u32 %v1455, 7
    %v1457 = vsub.s32 0, %v1456
    %v1458 = vrot.slane %v1454, %v1457
    %1459 = vmatprep.subr.mxu0 0.0
    %1460 = vmatpush1.msra.mxu0 %v1453
    %1461 = vmatprep.subr.mxu0 0.0
    %1462 = vmatpush1.msra.mxu0 %v1452
    %1463 = vmatprep.subr.mxu0 0.0
    %1464 = vmatpush1.msra.mxu0 %v1451
    %1465 = vmatprep.subr.mxu0 0.0
    %1466 = vmatpush1.msra.mxu0 %v1450
    %1467 = vmatprep.subr.mxu0 0.0
    %1468 = vmatpush1.msra.mxu0 %v1449
    %1469 = vmatprep.subr.mxu0 0.0
    %1470 = vmatpush1.msra.mxu0 %v1448
    %1471 = vmatprep.subr.mxu0 0.0
    %1472 = vmatpush1.msra.mxu0 %v1447
    %1473 = vmatprep.subr.mxu0 0.0
    %1474 = vmatpush1.msra.mxu0 %v1446
    %1475 = vmatprep.subr.mxu0 0.0
    %1476 = vmatpush1.msra.mxu0 %v1445
    %1477 = vmatprep.subr.mxu0 0.0
    %1478 = vmatpush1.msra.mxu0 %v1444
    %1479 = vmatprep.subr.mxu0 0.0
    %1480 = vmatpush1.msra.mxu0 %v1443
    %1481 = vmatprep.subr.mxu0 0.0
    %1482 = vmatpush1.msra.mxu0 %v1442
    %1483 = vmatprep.subr.mxu0 0.0
    %1484 = vmatpush1.msra.mxu0 %v1441
    %1485 = vmatprep.subr.mxu0 0.0
    %1486 = vmatpush1.msra.mxu0 %v1440
    %1487 = vmatprep.subr.mxu0 0.0
    %1488 = vmatpush1.msra.mxu0 %v1439
    %1489 = vmatprep.subr.mxu0 0.0
    %1490 = vmatpush1.msra.mxu0 %v1438
    %1491 = vmatprep.subr.mxu0 0.0
    %1492 = vmatpush2.msra.mxu0 0.0
    %1493 = vmatprep.subr.mxu0 0.0
    %1494 = vmatpush2.msra.mxu0 0.0
    %1495 = vmatprep.subr.mxu0 0.0
    %1496 = vmatpush2.msra.mxu0 0.0
    %1497 = vmatprep.subr.mxu0 0.0
    %1498 = vmatpush2.msra.mxu0 0.0
    %1499 = vmatprep.subr.mxu0 0.0
    %1500 = vmatpush2.msra.mxu0 0.0
    %1501 = vmatprep.subr.mxu0 0.0
    %1502 = vmatpush2.msra.mxu0 0.0
    %1503 = vmatprep.subr.mxu0 0.0
    %1504 = vmatpush2.msra.mxu0 0.0
    %1505 = vmatprep.subr.mxu0 0.0
    %1506 = vmatpush2.msra.mxu0 0.0
    %1507 = vmatprep.subr.mxu0 0.0
    %1508 = vmatpush2.msra.mxu0 0.0
    %1509 = vmatprep.subr.mxu0 0.0
    %1510 = vmatpush2.msra.mxu0 0.0
    %1511 = vmatprep.subr.mxu0 0.0
    %1512 = vmatpush2.msra.mxu0 0.0
    %1513 = vmatprep.subr.mxu0 0.0
    %1514 = vmatpush2.msra.mxu0 0.0
    %1515 = vmatprep.subr.mxu0 0.0
    %1516 = vmatpush2.msra.mxu0 0.0
    %1517 = vmatprep.subr.mxu0 0.0
    %1518 = vmatpush2.msra.mxu0 0.0
    %1519 = vmatprep.subr.mxu0 0.0
    %1520 = vmatpush2.msra.mxu0 0.0
    %1521 = vmatprep.subr.mxu0 0.0
    %1522 = vmatpush2.msra.mxu0 0.0
    %1523 = vmatprep.mubr.f32.mxu0 0.0
    %1524 = vmatmul.mubr.f32.gmra.mxu0 %v1437
    %v1525 = vpop.f32.mrf.mxu0
    %v1526 = vadd.f32 %v1458, %v1525
    %v1527 = vpop.f32.mrf.mxu0
    %1528 = vdwg.mxu0
    %1529 = vmax.xlane.f32.xlu0 %v1526
    %v1530 = vpop.xlane.xlu0 %1529
    %v1531 = vsub.f32 %v1526, %v1530
    %v1532 = vmul.f32 %v1531, 1.442695
    %v1533 = vpow.pop %v1532
    %1534 = vadd.xlane.f32.xlu0 %v1533
    %v1535 = vpop.xlane.xlu0 %1534
    %v1536 = vlog2.pop %v1535
    %v1537 = vmul.f32 %v1536, 0.6931472
    %v1538 = vsub.f32 %v1531, %v1537
    %1539 = vst [vmem:[#allocation8] sm:$0xff] %v1538
    // Predicated region
    $region26: #{tpu_custom_call.1} parent=1 // pred_check
      _
    $region27: #{tpu_custom_call.1} parent=1 // pred_check_branch
      %1541 = sbr.rel (0) target = $region29
    $region28: #{tpu_custom_call.1} parent=1 // pred_region
      %s1543 = ssub.s32 128, 128
      %1544 = vsyncadd [#allocation4], %s1543
      %s1546 = sshll.u32 [#allocation8], 4
      %s1547 = int_to_ptr.vmem [resolvable:$true] %s1546
      %1549 = dma.vmem_to_hbm [thread:$0]  %s1547, 128, %s3, [#allocation4]
    $region29: #{tpu_custom_call.1} parent=1 // pred_fallthru
      _
    // Predicated region
    $region30: #{tpu_custom_call.1} parent=1 // pred_check
      _
    $region31: #{tpu_custom_call.1} parent=1 // pred_check_branch
      %1551 = sbr.rel (0) target = $region33
    $region32: #{tpu_custom_call.1} parent=1 // pred_region
      %1552 = dma.done [#allocation4], 128
    $region33: #{tpu_custom_call.1} parent=1 // pred_fallthru
      _
    %1553 = vsyncpa [#allocation3], 1
    %1554 = vsyncpa [#allocation6], 1
    %1555 = vsyncpa [#allocation4], 1

</llo_original>
